<compile_context>
chip_gen: v7x
topology: tpu7x:2x2x1
jax: 0.10.0
libtpu: 0.0.40
codegen_flags: <defaults>
</compile_context>

<pallas_src>
import functools

import jax
import jax.numpy as jnp
from jax import lax
from jax.experimental import pallas as pl
from jax.experimental.pallas import tpu as pltpu


def _round_up(n: int, m: int) -> int:
    return ((n + m - 1) // m) * m


def _attentive_pooling_kernel(x_ref, w_ref, b_ref, o_ref, *, seq_len):
    # x_ref: (TB, S, D) VMEM, native dtype
    # w_ref: (1, 1, D)  VMEM, native dtype (Linear(D,1).weight as a "query" vector)
    # b_ref: (1, 1)     SMEM f32 (Linear bias; softmax-invariant, kept for parity)
    # o_ref: (TB, 1, D) VMEM
    TB, S, D = x_ref.shape
    x = x_ref[...]                                      # keep native dtype (no f32 copy)
    w = jnp.broadcast_to(w_ref[...], (TB, 1, D))        # replicated query, (TB, 1, D)

    # scores[b, 0, s] = <x[b, s, :], w> + bias  --- MXU, f32 accumulation
    s = jnp.einsum("bqd,bkd->bqk", w, x,
                   preferred_element_type=jnp.float32)  # (TB, 1, S)
    s = s + b_ref[0, 0]

    if seq_len != S:  # static branch: mask zero-padded sequence positions
        pos = lax.broadcasted_iota(jnp.int32, (TB, 1, S), 2)
        # Large finite negative (not -inf): exp(mask - m) underflows cleanly to 0
        # and no inf/NaN arithmetic is possible.
        s = jnp.where(pos < seq_len, s, -1e30)

    # Numerically-stable softmax over the sequence (lane) axis, in f32.
    m = jnp.max(s, axis=-1, keepdims=True)               # (TB, 1, 1)
    e = jnp.exp(s - m)                                    # (TB, 1, S)   EUP
    denom = jnp.sum(e, axis=-1, keepdims=True)            # (TB, 1, 1)   XLU
    att = e * pl.reciprocal(denom, approx=True)            # (TB, 1, S)   EUP slot

    # pooled[b, 0, :] = sum_s att[b, 0, s] * x[b, s, :]  --- MXU, f32 accumulation
    pooled = jnp.einsum("bqk,bkd->bqd", att.astype(x.dtype), x,
                        preferred_element_type=jnp.float32)  # (TB, 1, D)
    o_ref[...] = pooled.astype(o_ref.dtype)


def attentive_pooling(x, weight, bias, *, max_block_bytes=4 * 1024 * 1024):
    """AttentivePooling forward.

    x:      (B, S, D) activations
    weight: (1, D)    torch nn.Linear(D, 1).weight
    bias:   (1,)      torch nn.Linear(D, 1).bias
    returns (B, D)
    """
    B, S, D = x.shape
    out_dtype = x.dtype

    # Pad the feature dim to a lane multiple (128) and the sequence dim to a sublane
    # multiple (8) so tiles are dense. Zero feature padding is a no-op (the weight is
    # zero-padded too); padded sequence rows are masked inside the kernel.
    D_pad = _round_up(D, 128)
    S_pad = _round_up(S, 8)
    if (S_pad, D_pad) != (S, D):
        x = jnp.pad(x, ((0, 0), (0, S_pad - S), (0, D_pad - D)))
    w = jnp.pad(weight.astype(x.dtype), ((0, 0), (0, D_pad - D))).reshape(1, 1, D_pad)
    b = bias.reshape(1, 1).astype(jnp.float32)

    # Batch block: large enough to amortize per-grid-step overhead (~0.35 us/step) and
    # issue long DMAs, small enough that double-buffered x blocks stay comfortably
    # inside the scoped-VMEM budget on every generation (incl. v7x's 64 MiB VMEM).
    # For B > 8 we force >= 2 grid steps so the "parallel" axis can shard across
    # v7x's two TensorCores.
    bytes_per_batch_row = S_pad * D_pad * x.dtype.itemsize
    if B <= 8:
        TB = B                                             # single step, block == full batch
    else:
        TB = min(B // 2, max(1, max_block_bytes // bytes_per_batch_row))
        TB = max(8, (TB // 8) * 8)                         # sublane-aligned, >=2 grid steps
    B_pad = _round_up(B, TB)
    if B_pad != B:
        x = jnp.pad(x, ((0, B_pad - B), (0, 0), (0, 0)))   # padded rows are sliced off
    grid = (B_pad // TB,)

    cost = pl.CostEstimate(
        flops=4 * B_pad * S_pad * D_pad,                    # two (1,D)x(D,S)-style contractions
        transcendentals=B_pad * S_pad,                      # exp in the softmax
        bytes_accessed=(B_pad * S_pad * D_pad               # x read
                        + B_pad * D_pad                     # pooled output write
                        + D_pad) * x.dtype.itemsize,        # weight read
    )

    kernel = functools.partial(_attentive_pooling_kernel, seq_len=S)
    out = pl.pallas_call(
        kernel,
        out_shape=jax.ShapeDtypeStruct((B_pad, 1, D_pad), out_dtype),
        grid_spec=pl.GridSpec(
            grid=grid,
            in_specs=[
                pl.BlockSpec((TB, S_pad, D_pad), lambda i: (i, 0, 0)),
                pl.BlockSpec((1, 1, D_pad), lambda i: (0, 0, 0)),
                pl.BlockSpec((1, 1), lambda i: (0, 0),
                             memory_space=pltpu.MemorySpace.SMEM),
            ],
            out_specs=pl.BlockSpec((TB, 1, D_pad), lambda i: (i, 0, 0)),
        ),
        compiler_params=pltpu.CompilerParams(
            dimension_semantics=("parallel",),         # shards the batch grid over v7x's 2 TCs
            vmem_limit_bytes=32 * 1024 * 1024,         # safe budget on v5e/v6e/v7x
        ),
        cost_estimate=cost,
    )(x, w, b)
    return out.reshape(B_pad, D_pad)[:B, :D]


def attentive_pooling_ref(x, weight, bias):
    # Pure-JAX reference replicating the PyTorch forward exactly.
    scores = jnp.einsum("bsd,od->bs", x, weight) + bias[0]   # (B, S)
    att = jax.nn.softmax(scores, axis=1)[..., None]          # (B, S, 1)
    return jnp.sum(x * att, axis=1)                          # (B, D)


if __name__ == "__main__":
    key = jax.random.PRNGKey(0)
    k_x, k_w, k_b = jax.random.split(key, 3)

    # Test 1: layout-aligned shapes (no padding path), multi-step batch grid.
    B, S, D = 16, 16, 128
    x = jax.random.normal(k_x, (B, S, D), dtype=jnp.float32)
    weight = jax.random.normal(k_w, (1, D), dtype=jnp.float32) * 0.1   # Linear(D,1).weight
    bias = jax.random.normal(k_b, (1,), dtype=jnp.float32) * 0.1       # Linear(D,1).bias

    out = jax.block_until_ready(attentive_pooling(x, weight, bias))
    ref = attentive_pooling_ref(x, weight, bias)
    assert out.shape == (B, D), out.shape
    # rtol slack is solely for the EUP approximate reciprocal in the softmax
    # normalization; with approx=False the kernel matches the reference to ~1e-6.
    assert jnp.allclose(out, ref, rtol=1e-2, atol=1e-4), (
        "mismatch vs reference (aligned), max abs err = %f"
        % float(jnp.max(jnp.abs(out - ref))))

    # Test 2: ragged shapes exercising the pad-to-(8,128) + sequence-mask path.
    B2, S2, D2 = 6, 12, 96
    x2 = jax.random.normal(k_x, (B2, S2, D2), dtype=jnp.float32)
    weight2 = jax.random.normal(k_w, (1, D2), dtype=jnp.float32) * 0.1
    bias2 = jax.random.normal(k_b, (1,), dtype=jnp.float32) * 0.1

    out2 = jax.block_until_ready(attentive_pooling(x2, weight2, bias2))
    ref2 = attentive_pooling_ref(x2, weight2, bias2)
    assert out2.shape == (B2, D2), out2.shape
    assert jnp.allclose(out2, ref2, rtol=1e-2, atol=1e-4), (
        "mismatch vs reference (padded), max abs err = %f"
        % float(jnp.max(jnp.abs(out2 - ref2))))

    print("KERNEL_OK")
</pallas_src>

<mosaic_0001>
module attributes {stable_mosaic.version = 11 : i64} {
  func.func @_attentive_pooling_kernel(%arg0: i32, %arg1: memref<8x16x128xf32, #tpu.memory_space<vmem>>, %arg2: memref<1x1x128xf32, #tpu.memory_space<vmem>>, %arg3: memref<1x1xf32, #tpu.memory_space<smem>>, %arg4: memref<8x1x128xf32, #tpu.memory_space<vmem>>) attributes {dimension_semantics = [#tpu.dimension_semantics<parallel>], iteration_bounds = array<i64: 2>, scalar_prefetch = 0 : i64, scratch_operands = 0 : i64, tpu.core_type = #tpu.core_type<tc>, window_params = [{transform_indices = @transform_0, window_bounds = array<i64: 8, 16, 128>}, {pipeline_mode = #tpu.pipeline_mode<synchronous>, transform_indices = @transform_1, window_bounds = array<i64: 1, 1, 128>}, {transform_indices = @transform_2, window_bounds = array<i64: 1, 1>}, {transform_indices = @transform_3, window_bounds = array<i64: 8, 1, 128>}]} {
    %c0 = arith.constant 0 : index
    %c0_0 = arith.constant 0 : index
    %c0_1 = arith.constant 0 : index
    %0 = vector.load %arg1[%c0, %c0_0, %c0_1] : memref<8x16x128xf32, #tpu.memory_space<vmem>>, vector<8x16x128xf32>
    %c0_2 = arith.constant 0 : index
    %c0_3 = arith.constant 0 : index
    %c0_4 = arith.constant 0 : index
    %1 = vector.load %arg2[%c0_2, %c0_3, %c0_4] : memref<1x1x128xf32, #tpu.memory_space<vmem>>, vector<1x1x128xf32>
    %2 = vector.shape_cast %1 : vector<1x1x128xf32> to vector<1x1x128xf32>
    %3 = vector.broadcast %2 : vector<1x1x128xf32> to vector<8x1x128xf32>
    "tpu.trace_start"() <{level = 10 : i32, message = "bqd,bkd->bqk"}> : () -> ()
    %cst = arith.constant dense<0.000000e+00> : vector<8x1x16xf32>
    %4 = tpu.matmul %3, %0, %cst {dimension_numbers = #tpu.dot_dimension_numbers<[2], [2], [1], [1], [0, 0, 0, 1, 1, 1], [0], [0]>} : vector<8x1x128xf32>, vector<8x16x128xf32>, vector<8x1x16xf32> -> vector<8x1x16xf32>
    "tpu.trace_stop"() : () -> ()
    %c0_5 = arith.constant 0 : index
    %c0_6 = arith.constant 0 : index
    %5 = memref.load %arg3[%c0_5, %c0_6] : memref<1x1xf32, #tpu.memory_space<smem>>
    %6 = vector.broadcast %5 : f32 to vector<8x1x16xf32>
    %7 = arith.addf %4, %6 : vector<8x1x16xf32>
    %cst_7 = arith.constant dense<0xFF800000> : vector<8x1xf32>
    %8 = vector.multi_reduction <maximumf>, %7, %cst_7 [2] : vector<8x1x16xf32> to vector<8x1xf32>
    %9 = vector.shape_cast %8 : vector<8x1xf32> to vector<8x1x1xf32>
    %10 = vector.broadcast %9 : vector<8x1x1xf32> to vector<8x1x16xf32>
    %11 = arith.subf %7, %10 : vector<8x1x16xf32>
    %12 = math.exp %11 : vector<8x1x16xf32>
    %cst_8 = arith.constant dense<0.000000e+00> : vector<8x1xf32>
    %13 = vector.multi_reduction <add>, %12, %cst_8 [2] : vector<8x1x16xf32> to vector<8x1xf32>
    %14 = vector.shape_cast %13 : vector<8x1xf32> to vector<8x1x1xf32>
    %15 = tpu.reciprocal %14 {approx = true} : vector<8x1x1xf32> -> vector<8x1x1xf32>
    %16 = vector.broadcast %15 : vector<8x1x1xf32> to vector<8x1x16xf32>
    %17 = arith.mulf %12, %16 : vector<8x1x16xf32>
    "tpu.trace_start"() <{level = 10 : i32, message = "bqk,bkd->bqd"}> : () -> ()
    %cst_9 = arith.constant dense<0.000000e+00> : vector<8x1x128xf32>
    %18 = tpu.matmul %17, %0, %cst_9 {dimension_numbers = #tpu.dot_dimension_numbers<[2], [1], [1], [2], [0, 0, 0, 1, 1, 2], [0], [0]>} : vector<8x1x16xf32>, vector<8x16x128xf32>, vector<8x1x128xf32> -> vector<8x1x128xf32>
    "tpu.trace_stop"() : () -> ()
    %c0_10 = arith.constant 0 : index
    %c0_11 = arith.constant 0 : index
    %c0_12 = arith.constant 0 : index
    %19 = vector.load %arg4[%c0_10, %c0_11, %c0_12] : memref<8x1x128xf32, #tpu.memory_space<vmem>>, vector<8x1x128xf32>
    tpu.vector_store %arg4[%c0_10, %c0_11, %c0_12], %18 {strides = array<i32>} : memref<8x1x128xf32, #tpu.memory_space<vmem>>, vector<8x1x128xf32>,
    return
  }
  func.func @transform_0(%arg0: i32) -> (i32, i32, i32) {
    %c0_i32 = arith.constant 0 : i32
    %c0_i32_0 = arith.constant 0 : i32
    %c0_i32_1 = arith.constant 0 : i32
    return %arg0, %c0_i32, %c0_i32_0 : i32, i32, i32
  }
  func.func @transform_1(%arg0: i32) -> (i32, i32, i32) {
    %c0_i32 = arith.constant 0 : i32
    %c0_i32_0 = arith.constant 0 : i32
    %c0_i32_1 = arith.constant 0 : i32
    %c0_i32_2 = arith.constant 0 : i32
    return %c0_i32, %c0_i32_0, %c0_i32_1 : i32, i32, i32
  }
  func.func @transform_2(%arg0: i32) -> (i32, i32) {
    %c0_i32 = arith.constant 0 : i32
    %c0_i32_0 = arith.constant 0 : i32
    %c0_i32_1 = arith.constant 0 : i32
    return %c0_i32, %c0_i32_0 : i32, i32
  }
  func.func @transform_3(%arg0: i32) -> (i32, i32, i32) {
    %c0_i32 = arith.constant 0 : i32
    %c0_i32_0 = arith.constant 0 : i32
    %c0_i32_1 = arith.constant 0 : i32
    return %arg0, %c0_i32, %c0_i32_0 : i32, i32, i32
  }
}

</mosaic_0001>

<llo_original>
// kernel: tpu_custom_call.1
$region0: #{tpu_custom_call.1}
  #allocation0 [shape = 'u32[]', space=smem, size = 0x4, offset = 0x4, fixed_abs, tag = 'smem constant byte address 0x4 - core index']
  #allocation1 [shape = 'u32[144,128]{1,0:T(1,128)}', space=vmem, size = 0x12000, scoped, tag = 'internal scratch']
  #allocation2 [shape = 'f32[1,1]{1,0:T(1,128)S(6)}', space=smem, size = 0x200, scoped, tag = 'scoped memory for tpu_custom_call.1']
  %s0 = inlined_call_operand.hbm [shape: f32[16,16,128], index: 0, kind: input, shape index: {}]
  %s1 = inlined_call_operand.vmem [shape: f32[1,1,128], index: 1, kind: input, shape index: {}]
  %s2 = inlined_call_operand.<no memory space> [shape: f32[1,1], index: 2, kind: input, shape index: {}]
  %s3 = inlined_call_operand.hbm [shape: f32[16,1,128], index: 3, kind: output, shape index: {}]
  %s4 = sld [smem:[#allocation0]]
  $region49: #{tpu_custom_call.1} parent=0
    _
  %s6 = ssub.s32 1, %s4
  %s7 = scalar_select 0, %s6, %s4
  %8 = sst [smem:[#allocation2]] %s2
  $region1: #{tpu_custom_call.1} parent=0
    #allocation3 [shape = 'u8[131072]{0}', space=vmem, size = 0x20000, scoped, tag = 'input window, operand 0']
    #allocation4 [shape = 's32[2]{0}', space=sflag, size = 0x8, scoped, tag = 'scoped memory for tpu_custom_call.1']
    #allocation5 [shape = 's32[2]{0}', space=sflag, size = 0x8, scoped, tag = 'scoped memory for tpu_custom_call.1']
    #allocation6 [shape = 'u8[8192]{0}', space=vmem, size = 0x2000, scoped, tag = 'output window, operand 0']
    %9 = vsyncpa [#allocation4], 0
    %s10 = scalar_lea.sflag [#allocation4], 1
    %11 = vsyncpa %s10, 0
    %12 = vsyncpa [#allocation5], 0
    %s13 = scalar_lea.sflag [#allocation5], 1
    %14 = vsyncpa %s13, 0
    loop: start=0, step=1, limit=4
    $region2: #{tpu_custom_call.1} parent=1 // loop_pre_header
      _
    $region3: #{tpu_custom_call.1} parent=1 // loop_header
      %s16 = sphi 0, %s20
      %p17 = scmp.ge.s32.totalorder %s16, 4
      %s26 = sphi 0, %s28
      %s29 = sphi 0, %s26
      %s30 = sphi 0, %s29
      %s46 = sphi 0, %s30
      %s50 = sphi 0, %s50
      %s52 = sphi 0, %s50
      %s53 = sphi 0, %s52
      %s67 = sphi 0, %s53
      %s71 = sphi 0, %s71
      %s73 = sphi 0, %s71
      %s74 = sphi 0, %s73
      %s88 = sphi 0, %s74
      %s94 = sphi 0, %s96
      %s97 = sphi 0, %s94
      %s98 = sphi 0, %s97
      %s114 = sphi 0, %s98
    $region4: #{tpu_custom_call.1} parent=1 // loop_header_branch
      %19 = sbr.rel (%p17) target = $region8
    $region5: #{tpu_custom_call.1} parent=1 // loop_body
      %s21 = ssub.s32 %s16, 1
      %s22 = ssub.s32 %s16, 2
      %s23 = sadd.s32 %s16, 1
      %s24 = ssub.s32 %s16, %s23
      %p25 = scmp.eq.s32.totalorder %s24, 0
      %s27 = sadd.s32 %s26, 1
      %s28 = scalar_select %p25, %s26, %s27
      %p31 = pneg %p25
      %p32 = scmp.eq.s32.totalorder %s16, 1
      %p33 = por %p31, %p32
      %p34 = scmp.ne.s32.totalorder %s26, %s29
      %p35 = scmp.eq.s32.totalorder %s16, 0
      %p36 = por %p34, %p35
      %p37 = scmp.ne.s32.totalorder %s26, %s29
      %p38 = scmp.eq.s32.totalorder %s21, 1
      %p39 = por %p37, %p38
      %p40 = scmp.ne.s32.totalorder %s29, %s30
      %p41 = scmp.eq.s32.totalorder %s21, 0
      %p42 = por %p40, %p41
      %p43 = scmp.ne.s32.totalorder %s29, %s30
      %p44 = scmp.eq.s32.totalorder %s22, 1
      %p45 = por %p43, %p44
      %p47 = scmp.ne.s32.totalorder %s30, %s46
      %p48 = scmp.eq.s32.totalorder %s22, 0
      %p49 = por %p47, %p48
      %s51 = sadd.s32 %s50, 1
      %p54 = scmp.eq.s32.totalorder %s16, 1
      %p55 = scmp.ne.s32.totalorder %s50, %s52
      %p56 = scmp.eq.s32.totalorder %s16, 0
      %p57 = por %p55, %p56
      %p58 = scmp.ne.s32.totalorder %s50, %s52
      %p59 = scmp.eq.s32.totalorder %s21, 1
      %p60 = por %p58, %p59
      %p61 = scmp.ne.s32.totalorder %s52, %s53
      %p62 = scmp.eq.s32.totalorder %s21, 0
      %p63 = por %p61, %p62
      %p64 = scmp.ne.s32.totalorder %s52, %s53
      %p65 = scmp.eq.s32.totalorder %s22, 1
      %p66 = por %p64, %p65
      %p68 = scmp.ne.s32.totalorder %s53, %s67
      %p69 = scmp.eq.s32.totalorder %s22, 0
      %p70 = por %p68, %p69
      %s72 = sadd.s32 %s71, 1
      %p75 = scmp.eq.s32.totalorder %s16, 1
      %p76 = scmp.ne.s32.totalorder %s71, %s73
      %p77 = scmp.eq.s32.totalorder %s16, 0
      %p78 = por %p76, %p77
      %p79 = scmp.ne.s32.totalorder %s71, %s73
      %p80 = scmp.eq.s32.totalorder %s21, 1
      %p81 = por %p79, %p80
      %p82 = scmp.ne.s32.totalorder %s73, %s74
      %p83 = scmp.eq.s32.totalorder %s21, 0
      %p84 = por %p82, %p83
      %p85 = scmp.ne.s32.totalorder %s73, %s74
      %p86 = scmp.eq.s32.totalorder %s22, 1
      %p87 = por %p85, %p86
      %p89 = scmp.ne.s32.totalorder %s74, %s88
      %p90 = scmp.eq.s32.totalorder %s22, 0
      %p91 = por %p89, %p90
      %s92 = ssub.s32 %s16, %s23
      %p93 = scmp.eq.s32.totalorder %s92, 0
      %s95 = sadd.s32 %s94, 1
      %s96 = scalar_select %p93, %s94, %s95
      %p99 = pneg %p93
      %p100 = scmp.eq.s32.totalorder %s16, 1
      %p101 = por %p99, %p100
      %p102 = scmp.ne.s32.totalorder %s94, %s97
      %p103 = scmp.eq.s32.totalorder %s16, 0
      %p104 = por %p102, %p103
      %p105 = scmp.ne.s32.totalorder %s94, %s97
      %p106 = scmp.eq.s32.totalorder %s21, 1
      %p107 = por %p105, %p106
      %p108 = scmp.ne.s32.totalorder %s97, %s98
      %p109 = scmp.eq.s32.totalorder %s21, 0
      %p110 = por %p108, %p109
      %p111 = scmp.ne.s32.totalorder %s97, %s98
      %p112 = scmp.eq.s32.totalorder %s22, 1
      %p113 = por %p111, %p112
      %p115 = scmp.ne.s32.totalorder %s98, %s114
      %p116 = scmp.eq.s32.totalorder %s22, 0
      %p117 = por %p115, %p116
      %p118 = scmp.le.s32.totalorder 1, %s16
      %p119 = scmp.lt.s32.totalorder %s16, 3
      %p120 = pnand %p118, %p119
      %p121 = pneg %p120
      // Predicated region
      $region9: #{tpu_custom_call.1} parent=5 // pred_check
        _
      $region10: #{tpu_custom_call.1} parent=5 // pred_check_branch
        %123 = sbr.rel (%p120) target = $region12
      $region11: #{tpu_custom_call.1} parent=5 // pred_region
        %s124 = ssub.s32 %s16, 1
        // Predicated region
        $region13: #{tpu_custom_call.1} parent=11 // pred_check
          %p125 = pneg %p63
        $region14: #{tpu_custom_call.1} parent=11 // pred_check_branch
          %127 = sbr.rel (%p125) target = $region16
        $region15: #{tpu_custom_call.1} parent=11 // pred_region
          _
        $region16: #{tpu_custom_call.1} parent=11 // pred_fallthru
          _
        // Predicated region
        $region17: #{tpu_custom_call.1} parent=11 // pred_check
          %p128 = pneg %p84
        $region18: #{tpu_custom_call.1} parent=11 // pred_check_branch
          %130 = sbr.rel (%p128) target = $region20
        $region19: #{tpu_custom_call.1} parent=11 // pred_region
          _
        $region20: #{tpu_custom_call.1} parent=11 // pred_fallthru
          _
      $region12: #{tpu_custom_call.1} parent=5 // pred_fallthru
        _
      %p131 = scmp.lt.s32.totalorder %s16, 2
      // Predicated region
      $region21: #{tpu_custom_call.1} parent=5 // pred_check
        %p132 = pneg %p131
      $region22: #{tpu_custom_call.1} parent=5 // pred_check_branch
        %134 = sbr.rel (%p132) target = $region24
      $region23: #{tpu_custom_call.1} parent=5 // pred_region
        // Predicated region
        $region25: #{tpu_custom_call.1} parent=23 // pred_check
          %p135 = pneg %p36
        $region26: #{tpu_custom_call.1} parent=23 // pred_check_branch
          %137 = sbr.rel (%p135) target = $region28
        $region27: #{tpu_custom_call.1} parent=23 // pred_region
          %s138 = sand.u32 %s26, 1
          %s139 = scalar_lea.sflag [#allocation4], %s138
          %s140 = sand.u32 %s26, 1
          %s141 = smul.addr %s140, 128
          %s142 = scalar_lea.vmem [#allocation3], %s141
          %s143 = smul.u32 8, %s16
          %s145 = ssub.s32 2048, 2048
          %146 = vsyncadd %s139, %s145
          %s147 = smul.addr %s143, 2
          %s148 = smul.addr %s147, 128
          %s149 = scalar_lea.hbm %s0, %s148
          %s150 = sshll.u32 %s142, 4
          %s151 = int_to_ptr.vmem [resolvable:$true] %s150
          %156 = dma.hbm_to_vmem [thread:$0]  %s149, 2048, %s151, %s139, 128, 128, 8
        $region28: #{tpu_custom_call.1} parent=23 // pred_fallthru
          _
      $region24: #{tpu_custom_call.1} parent=5 // pred_fallthru
        _
      %p157 = scmp.le.s32.totalorder 1, %s16
      %p158 = scmp.lt.s32.totalorder %s16, 3
      %p159 = pnand %p157, %p158
      %p160 = pneg %p159
      // Predicated region
      $region29: #{tpu_custom_call.1} parent=5 // pred_check
        _
      $region30: #{tpu_custom_call.1} parent=5 // pred_check_branch
        %162 = sbr.rel (%p159) target = $region32
      $region31: #{tpu_custom_call.1} parent=5 // pred_region
        %s163 = ssub.s32 %s16, 1
        %s164 = sand.u32 %s29, 1
        %s165 = scalar_lea.sflag [#allocation4], %s164
        %s166 = sand.u32 %s29, 1
        %s167 = smul.addr %s166, 128
        %s168 = scalar_lea.vmem [#allocation3], %s167
        // Predicated region
        $region33: #{tpu_custom_call.1} parent=31 // pred_check
          %p169 = pneg %p42
        $region34: #{tpu_custom_call.1} parent=31 // pred_check_branch
          %171 = sbr.rel (%p169) target = $region36
        $region35: #{tpu_custom_call.1} parent=31 // pred_region
          %172 = dma.done %s165, 2048
        $region36: #{tpu_custom_call.1} parent=31 // pred_fallthru
          _
        %s173 = sand.u32 %s29, 1
        %s174 = scalar_lea.sflag [#allocation4], %s173
        %s175 = sand.u32 %s29, 1
        %s176 = smul.addr %s175, 128
        %s177 = scalar_lea.vmem [#allocation3], %s176
        %p178 = pneg %p42
        %p179 = pneg %p39
        %p180 = pneg %p63
        %p181 = pneg %p60
        %p182 = pneg %p84
        %p183 = pneg %p81
        %p184 = pneg %p110
        %p185 = pneg %p107
        %s186 = sand.u32 %s97, 1
        %s187 = scalar_lea.sflag [#allocation5], %s186
        %s188 = sand.u32 %s97, 1
        %s189 = smul.addr %s188, 8
        %s190 = scalar_lea.vmem [#allocation6], %s189
        %s191 = smul.u32 8, %s21
        %s192 = smul.u32 8, %s21
        %v193 = vld [vmem:[%s168] sm:$0xff]
        %v194 = vld [vmem:[%s168 + $0x8] sm:$0xff]
        %v195 = vld [vmem:[%s168 + $0x10] sm:$0xff]
        %v196 = vld [vmem:[%s168 + $0x18] sm:$0xff]
        %v197 = vld [vmem:[%s168 + $0x20] sm:$0xff]
        %v198 = vld [vmem:[%s168 + $0x28] sm:$0xff]
        %v199 = vld [vmem:[%s168 + $0x30] sm:$0xff]
        %v200 = vld [vmem:[%s168 + $0x38] sm:$0xff]
        %v201 = vld [vmem:[%s168 + $0x40] sm:$0xff]
        %v202 = vld [vmem:[%s168 + $0x48] sm:$0xff]
        %v203 = vld [vmem:[%s168 + $0x50] sm:$0xff]
        %v204 = vld [vmem:[%s168 + $0x58] sm:$0xff]
        %v205 = vld [vmem:[%s168 + $0x60] sm:$0xff]
        %v206 = vld [vmem:[%s168 + $0x68] sm:$0xff]
        %v207 = vld [vmem:[%s168 + $0x70] sm:$0xff]
        %v208 = vld [vmem:[%s168 + $0x78] sm:$0xff]
        %v209 = vld [vmem:[%s1] sm:$0x1]
        %s210 = sld [smem:[#allocation2]]
        %v211 = vstv %s210
        %212 = vmatprep.subr.mxu0 0.0
        %213 = vmatpush1.xpose.msra.mxu0 %v193
        %214 = vmatprep.subr.mxu0 0.0
        %215 = vmatpush1.xpose.msra.mxu0 %v194
        %216 = vmatprep.subr.mxu0 0.0
        %217 = vmatpush1.xpose.msra.mxu0 0.0
        %218 = vmatprep.subr.mxu0 0.0
        %219 = vmatpush1.xpose.msra.mxu0 0.0
        %220 = vmatprep.subr.mxu0 0.0
        %221 = vmatpush1.xpose.msra.mxu0 0.0
        %222 = vmatprep.subr.mxu0 0.0
        %223 = vmatpush1.xpose.msra.mxu0 0.0
        %224 = vmatprep.subr.mxu0 0.0
        %225 = vmatpush1.xpose.msra.mxu0 0.0
        %226 = vmatprep.subr.mxu0 0.0
        %227 = vmatpush1.xpose.msra.mxu0 0.0
        %228 = vmatprep.subr.mxu0 0.0
        %229 = vmatpush1.xpose.msra.mxu0 0.0
        %230 = vmatprep.subr.mxu0 0.0
        %231 = vmatpush1.xpose.msra.mxu0 0.0
        %232 = vmatprep.subr.mxu0 0.0
        %233 = vmatpush1.xpose.msra.mxu0 0.0
        %234 = vmatprep.subr.mxu0 0.0
        %235 = vmatpush1.xpose.msra.mxu0 0.0
        %236 = vmatprep.subr.mxu0 0.0
        %237 = vmatpush1.xpose.msra.mxu0 0.0
        %238 = vmatprep.subr.mxu0 0.0
        %239 = vmatpush1.xpose.msra.mxu0 0.0
        %240 = vmatprep.subr.mxu0 0.0
        %241 = vmatpush1.xpose.msra.mxu0 0.0
        %242 = vmatprep.subr.mxu0 0.0
        %243 = vmatpush1.xpose.msra.mxu0 0.0
        %244 = vmatprep.subr.mxu0 0.0
        %245 = vmatpush1.xpose.msra.mxu0 0.0
        %246 = vmatprep.subr.mxu0 0.0
        %247 = vmatpush1.xpose.msra.mxu0 0.0
        %248 = vmatprep.subr.mxu0 0.0
        %249 = vmatpush1.xpose.msra.mxu0 0.0
        %250 = vmatprep.subr.mxu0 0.0
        %251 = vmatpush1.xpose.msra.mxu0 0.0
        %252 = vmatprep.subr.mxu0 0.0
        %253 = vmatpush1.xpose.msra.mxu0 0.0
        %254 = vmatprep.subr.mxu0 0.0
        %255 = vmatpush1.xpose.msra.mxu0 0.0
        %256 = vmatprep.subr.mxu0 0.0
        %257 = vmatpush1.xpose.msra.mxu0 0.0
        %258 = vmatprep.subr.mxu0 0.0
        %259 = vmatpush1.xpose.msra.mxu0 0.0
        %260 = vmatprep.subr.mxu0 0.0
        %261 = vmatpush1.xpose.msra.mxu0 0.0
        %262 = vmatprep.subr.mxu0 0.0
        %263 = vmatpush1.xpose.msra.mxu0 0.0
        %264 = vmatprep.subr.mxu0 0.0
        %265 = vmatpush1.xpose.msra.mxu0 0.0
        %266 = vmatprep.subr.mxu0 0.0
        %267 = vmatpush1.xpose.msra.mxu0 0.0
        %268 = vmatprep.subr.mxu0 0.0
        %269 = vmatpush1.xpose.msra.mxu0 0.0
        %270 = vmatprep.subr.mxu0 0.0
        %271 = vmatpush1.xpose.msra.mxu0 0.0
        %272 = vmatprep.subr.mxu0 0.0
        %273 = vmatpush1.xpose.msra.mxu0 0.0
        %274 = vmatprep.subr.mxu0 0.0
        %275 = vmatpush1.xpose.msra.mxu0 0.0
        %276 = vmatprep.mubr.f32.mxu0 0.0
        %277 = vmatmul.mubr.f32.gmra.mrb[0].mxu0 %v209
        %v278 = vpop.f32.mrb[0].mxu0
        %v279 = vadd.f32 %v211, %v278
        %v280 = vpop.f32.mrb[0].mxu0
        %281 = vdwg.mxu0
        %282 = vmatprep.subr.mxu0 0.0
        %283 = vmatpush1.xpose.msra.mxu0 %v195
        %284 = vmatprep.subr.mxu0 0.0
        %285 = vmatpush1.xpose.msra.mxu0 %v196
        %286 = vmatprep.subr.mxu0 0.0
        %287 = vmatpush1.xpose.msra.mxu0 0.0
        %288 = vmatprep.subr.mxu0 0.0
        %289 = vmatpush1.xpose.msra.mxu0 0.0
        %290 = vmatprep.subr.mxu0 0.0
        %291 = vmatpush1.xpose.msra.mxu0 0.0
        %292 = vmatprep.subr.mxu0 0.0
        %293 = vmatpush1.xpose.msra.mxu0 0.0
        %294 = vmatprep.subr.mxu0 0.0
        %295 = vmatpush1.xpose.msra.mxu0 0.0
        %296 = vmatprep.subr.mxu0 0.0
        %297 = vmatpush1.xpose.msra.mxu0 0.0
        %298 = vmatprep.subr.mxu0 0.0
        %299 = vmatpush1.xpose.msra.mxu0 0.0
        %300 = vmatprep.subr.mxu0 0.0
        %301 = vmatpush1.xpose.msra.mxu0 0.0
        %302 = vmatprep.subr.mxu0 0.0
        %303 = vmatpush1.xpose.msra.mxu0 0.0
        %304 = vmatprep.subr.mxu0 0.0
        %305 = vmatpush1.xpose.msra.mxu0 0.0
        %306 = vmatprep.subr.mxu0 0.0
        %307 = vmatpush1.xpose.msra.mxu0 0.0
        %308 = vmatprep.subr.mxu0 0.0
        %309 = vmatpush1.xpose.msra.mxu0 0.0
        %310 = vmatprep.subr.mxu0 0.0
        %311 = vmatpush1.xpose.msra.mxu0 0.0
        %312 = vmatprep.subr.mxu0 0.0
        %313 = vmatpush1.xpose.msra.mxu0 0.0
        %314 = vmatprep.subr.mxu0 0.0
        %315 = vmatpush1.xpose.msra.mxu0 0.0
        %316 = vmatprep.subr.mxu0 0.0
        %317 = vmatpush1.xpose.msra.mxu0 0.0
        %318 = vmatprep.subr.mxu0 0.0
        %319 = vmatpush1.xpose.msra.mxu0 0.0
        %320 = vmatprep.subr.mxu0 0.0
        %321 = vmatpush1.xpose.msra.mxu0 0.0
        %322 = vmatprep.subr.mxu0 0.0
        %323 = vmatpush1.xpose.msra.mxu0 0.0
        %324 = vmatprep.subr.mxu0 0.0
        %325 = vmatpush1.xpose.msra.mxu0 0.0
        %326 = vmatprep.subr.mxu0 0.0
        %327 = vmatpush1.xpose.msra.mxu0 0.0
        %328 = vmatprep.subr.mxu0 0.0
        %329 = vmatpush1.xpose.msra.mxu0 0.0
        %330 = vmatprep.subr.mxu0 0.0
        %331 = vmatpush1.xpose.msra.mxu0 0.0
        %332 = vmatprep.subr.mxu0 0.0
        %333 = vmatpush1.xpose.msra.mxu0 0.0
        %334 = vmatprep.subr.mxu0 0.0
        %335 = vmatpush1.xpose.msra.mxu0 0.0
        %336 = vmatprep.subr.mxu0 0.0
        %337 = vmatpush1.xpose.msra.mxu0 0.0
        %338 = vmatprep.subr.mxu0 0.0
        %339 = vmatpush1.xpose.msra.mxu0 0.0
        %340 = vmatprep.subr.mxu0 0.0
        %341 = vmatpush1.xpose.msra.mxu0 0.0
        %342 = vmatprep.subr.mxu0 0.0
        %343 = vmatpush1.xpose.msra.mxu0 0.0
        %344 = vmatprep.subr.mxu0 0.0
        %345 = vmatpush1.xpose.msra.mxu0 0.0
        %346 = vmatprep.mubr.f32.mxu0 0.0
        %347 = vmatmul.mubr.f32.gmra.mrb[0].mxu0 %v209
        %v348 = vpop.f32.mrb[0].mxu0
        %v349 = vadd.f32 %v211, %v348
        %v350 = vpop.f32.mrb[0].mxu0
        %351 = vdwg.mxu0
        %352 = vmatprep.subr.mxu0 0.0
        %353 = vmatpush1.xpose.msra.mxu0 %v197
        %354 = vmatprep.subr.mxu0 0.0
        %355 = vmatpush1.xpose.msra.mxu0 %v198
        %356 = vmatprep.subr.mxu0 0.0
        %357 = vmatpush1.xpose.msra.mxu0 0.0
        %358 = vmatprep.subr.mxu0 0.0
        %359 = vmatpush1.xpose.msra.mxu0 0.0
        %360 = vmatprep.subr.mxu0 0.0
        %361 = vmatpush1.xpose.msra.mxu0 0.0
        %362 = vmatprep.subr.mxu0 0.0
        %363 = vmatpush1.xpose.msra.mxu0 0.0
        %364 = vmatprep.subr.mxu0 0.0
        %365 = vmatpush1.xpose.msra.mxu0 0.0
        %366 = vmatprep.subr.mxu0 0.0
        %367 = vmatpush1.xpose.msra.mxu0 0.0
        %368 = vmatprep.subr.mxu0 0.0
        %369 = vmatpush1.xpose.msra.mxu0 0.0
        %370 = vmatprep.subr.mxu0 0.0
        %371 = vmatpush1.xpose.msra.mxu0 0.0
        %372 = vmatprep.subr.mxu0 0.0
        %373 = vmatpush1.xpose.msra.mxu0 0.0
        %374 = vmatprep.subr.mxu0 0.0
        %375 = vmatpush1.xpose.msra.mxu0 0.0
        %376 = vmatprep.subr.mxu0 0.0
        %377 = vmatpush1.xpose.msra.mxu0 0.0
        %378 = vmatprep.subr.mxu0 0.0
        %379 = vmatpush1.xpose.msra.mxu0 0.0
        %380 = vmatprep.subr.mxu0 0.0
        %381 = vmatpush1.xpose.msra.mxu0 0.0
        %382 = vmatprep.subr.mxu0 0.0
        %383 = vmatpush1.xpose.msra.mxu0 0.0
        %384 = vmatprep.subr.mxu0 0.0
        %385 = vmatpush1.xpose.msra.mxu0 0.0
        %386 = vmatprep.subr.mxu0 0.0
        %387 = vmatpush1.xpose.msra.mxu0 0.0
        %388 = vmatprep.subr.mxu0 0.0
        %389 = vmatpush1.xpose.msra.mxu0 0.0
        %390 = vmatprep.subr.mxu0 0.0
        %391 = vmatpush1.xpose.msra.mxu0 0.0
        %392 = vmatprep.subr.mxu0 0.0
        %393 = vmatpush1.xpose.msra.mxu0 0.0
        %394 = vmatprep.subr.mxu0 0.0
        %395 = vmatpush1.xpose.msra.mxu0 0.0
        %396 = vmatprep.subr.mxu0 0.0
        %397 = vmatpush1.xpose.msra.mxu0 0.0
        %398 = vmatprep.subr.mxu0 0.0
        %399 = vmatpush1.xpose.msra.mxu0 0.0
        %400 = vmatprep.subr.mxu0 0.0
        %401 = vmatpush1.xpose.msra.mxu0 0.0
        %402 = vmatprep.subr.mxu0 0.0
        %403 = vmatpush1.xpose.msra.mxu0 0.0
        %404 = vmatprep.subr.mxu0 0.0
        %405 = vmatpush1.xpose.msra.mxu0 0.0
        %406 = vmatprep.subr.mxu0 0.0
        %407 = vmatpush1.xpose.msra.mxu0 0.0
        %408 = vmatprep.subr.mxu0 0.0
        %409 = vmatpush1.xpose.msra.mxu0 0.0
        %410 = vmatprep.subr.mxu0 0.0
        %411 = vmatpush1.xpose.msra.mxu0 0.0
        %412 = vmatprep.subr.mxu0 0.0
        %413 = vmatpush1.xpose.msra.mxu0 0.0
        %414 = vmatprep.subr.mxu0 0.0
        %415 = vmatpush1.xpose.msra.mxu0 0.0
        %416 = vmatprep.mubr.f32.mxu0 0.0
        %417 = vmatmul.mubr.f32.gmra.mrb[0].mxu0 %v209
        %v418 = vpop.f32.mrb[0].mxu0
        %v419 = vadd.f32 %v211, %v418
        %v420 = vpop.f32.mrb[0].mxu0
        %421 = vdwg.mxu0
        %422 = vmatprep.subr.mxu0 0.0
        %423 = vmatpush1.xpose.msra.mxu0 %v199
        %424 = vmatprep.subr.mxu0 0.0
        %425 = vmatpush1.xpose.msra.mxu0 %v200
        %426 = vmatprep.subr.mxu0 0.0
        %427 = vmatpush1.xpose.msra.mxu0 0.0
        %428 = vmatprep.subr.mxu0 0.0
        %429 = vmatpush1.xpose.msra.mxu0 0.0
        %430 = vmatprep.subr.mxu0 0.0
        %431 = vmatpush1.xpose.msra.mxu0 0.0
        %432 = vmatprep.subr.mxu0 0.0
        %433 = vmatpush1.xpose.msra.mxu0 0.0
        %434 = vmatprep.subr.mxu0 0.0
        %435 = vmatpush1.xpose.msra.mxu0 0.0
        %436 = vmatprep.subr.mxu0 0.0
        %437 = vmatpush1.xpose.msra.mxu0 0.0
        %438 = vmatprep.subr.mxu0 0.0
        %439 = vmatpush1.xpose.msra.mxu0 0.0
        %440 = vmatprep.subr.mxu0 0.0
        %441 = vmatpush1.xpose.msra.mxu0 0.0
        %442 = vmatprep.subr.mxu0 0.0
        %443 = vmatpush1.xpose.msra.mxu0 0.0
        %444 = vmatprep.subr.mxu0 0.0
        %445 = vmatpush1.xpose.msra.mxu0 0.0
        %446 = vmatprep.subr.mxu0 0.0
        %447 = vmatpush1.xpose.msra.mxu0 0.0
        %448 = vmatprep.subr.mxu0 0.0
        %449 = vmatpush1.xpose.msra.mxu0 0.0
        %450 = vmatprep.subr.mxu0 0.0
        %451 = vmatpush1.xpose.msra.mxu0 0.0
        %452 = vmatprep.subr.mxu0 0.0
        %453 = vmatpush1.xpose.msra.mxu0 0.0
        %454 = vmatprep.subr.mxu0 0.0
        %455 = vmatpush1.xpose.msra.mxu0 0.0
        %456 = vmatprep.subr.mxu0 0.0
        %457 = vmatpush1.xpose.msra.mxu0 0.0
        %458 = vmatprep.subr.mxu0 0.0
        %459 = vmatpush1.xpose.msra.mxu0 0.0
        %460 = vmatprep.subr.mxu0 0.0
        %461 = vmatpush1.xpose.msra.mxu0 0.0
        %462 = vmatprep.subr.mxu0 0.0
        %463 = vmatpush1.xpose.msra.mxu0 0.0
        %464 = vmatprep.subr.mxu0 0.0
        %465 = vmatpush1.xpose.msra.mxu0 0.0
        %466 = vmatprep.subr.mxu0 0.0
        %467 = vmatpush1.xpose.msra.mxu0 0.0
        %468 = vmatprep.subr.mxu0 0.0
        %469 = vmatpush1.xpose.msra.mxu0 0.0
        %470 = vmatprep.subr.mxu0 0.0
        %471 = vmatpush1.xpose.msra.mxu0 0.0
        %472 = vmatprep.subr.mxu0 0.0
        %473 = vmatpush1.xpose.msra.mxu0 0.0
        %474 = vmatprep.subr.mxu0 0.0
        %475 = vmatpush1.xpose.msra.mxu0 0.0
        %476 = vmatprep.subr.mxu0 0.0
        %477 = vmatpush1.xpose.msra.mxu0 0.0
        %478 = vmatprep.subr.mxu0 0.0
        %479 = vmatpush1.xpose.msra.mxu0 0.0
        %480 = vmatprep.subr.mxu0 0.0
        %481 = vmatpush1.xpose.msra.mxu0 0.0
        %482 = vmatprep.subr.mxu0 0.0
        %483 = vmatpush1.xpose.msra.mxu0 0.0
        %484 = vmatprep.subr.mxu0 0.0
        %485 = vmatpush1.xpose.msra.mxu0 0.0
        %486 = vmatprep.mubr.f32.mxu0 0.0
        %487 = vmatmul.mubr.f32.gmra.mrb[0].mxu0 %v209
        %v488 = vpop.f32.mrb[0].mxu0
        %v489 = vadd.f32 %v211, %v488
        %v490 = vpop.f32.mrb[0].mxu0
        %491 = vdwg.mxu0
        %492 = vmatprep.subr.mxu0 0.0
        %493 = vmatpush1.xpose.msra.mxu0 %v201
        %494 = vmatprep.subr.mxu0 0.0
        %495 = vmatpush1.xpose.msra.mxu0 %v202
        %496 = vmatprep.subr.mxu0 0.0
        %497 = vmatpush1.xpose.msra.mxu0 0.0
        %498 = vmatprep.subr.mxu0 0.0
        %499 = vmatpush1.xpose.msra.mxu0 0.0
        %500 = vmatprep.subr.mxu0 0.0
        %501 = vmatpush1.xpose.msra.mxu0 0.0
        %502 = vmatprep.subr.mxu0 0.0
        %503 = vmatpush1.xpose.msra.mxu0 0.0
        %504 = vmatprep.subr.mxu0 0.0
        %505 = vmatpush1.xpose.msra.mxu0 0.0
        %506 = vmatprep.subr.mxu0 0.0
        %507 = vmatpush1.xpose.msra.mxu0 0.0
        %508 = vmatprep.subr.mxu0 0.0
        %509 = vmatpush1.xpose.msra.mxu0 0.0
        %510 = vmatprep.subr.mxu0 0.0
        %511 = vmatpush1.xpose.msra.mxu0 0.0
        %512 = vmatprep.subr.mxu0 0.0
        %513 = vmatpush1.xpose.msra.mxu0 0.0
        %514 = vmatprep.subr.mxu0 0.0
        %515 = vmatpush1.xpose.msra.mxu0 0.0
        %516 = vmatprep.subr.mxu0 0.0
        %517 = vmatpush1.xpose.msra.mxu0 0.0
        %518 = vmatprep.subr.mxu0 0.0
        %519 = vmatpush1.xpose.msra.mxu0 0.0
        %520 = vmatprep.subr.mxu0 0.0
        %521 = vmatpush1.xpose.msra.mxu0 0.0
        %522 = vmatprep.subr.mxu0 0.0
        %523 = vmatpush1.xpose.msra.mxu0 0.0
        %524 = vmatprep.subr.mxu0 0.0
        %525 = vmatpush1.xpose.msra.mxu0 0.0
        %526 = vmatprep.subr.mxu0 0.0
        %527 = vmatpush1.xpose.msra.mxu0 0.0
        %528 = vmatprep.subr.mxu0 0.0
        %529 = vmatpush1.xpose.msra.mxu0 0.0
        %530 = vmatprep.subr.mxu0 0.0
        %531 = vmatpush1.xpose.msra.mxu0 0.0
        %532 = vmatprep.subr.mxu0 0.0
        %533 = vmatpush1.xpose.msra.mxu0 0.0
        %534 = vmatprep.subr.mxu0 0.0
        %535 = vmatpush1.xpose.msra.mxu0 0.0
        %536 = vmatprep.subr.mxu0 0.0
        %537 = vmatpush1.xpose.msra.mxu0 0.0
        %538 = vmatprep.subr.mxu0 0.0
        %539 = vmatpush1.xpose.msra.mxu0 0.0
        %540 = vmatprep.subr.mxu0 0.0
        %541 = vmatpush1.xpose.msra.mxu0 0.0
        %542 = vmatprep.subr.mxu0 0.0
        %543 = vmatpush1.xpose.msra.mxu0 0.0
        %544 = vmatprep.subr.mxu0 0.0
        %545 = vmatpush1.xpose.msra.mxu0 0.0
        %546 = vmatprep.subr.mxu0 0.0
        %547 = vmatpush1.xpose.msra.mxu0 0.0
        %548 = vmatprep.subr.mxu0 0.0
        %549 = vmatpush1.xpose.msra.mxu0 0.0
        %550 = vmatprep.subr.mxu0 0.0
        %551 = vmatpush1.xpose.msra.mxu0 0.0
        %552 = vmatprep.subr.mxu0 0.0
        %553 = vmatpush1.xpose.msra.mxu0 0.0
        %554 = vmatprep.subr.mxu0 0.0
        %555 = vmatpush1.xpose.msra.mxu0 0.0
        %556 = vmatprep.mubr.f32.mxu0 0.0
        %557 = vmatmul.mubr.f32.gmra.mrb[0].mxu0 %v209
        %v558 = vpop.f32.mrb[0].mxu0
        %v559 = vadd.f32 %v211, %v558
        %v560 = vpop.f32.mrb[0].mxu0
        %561 = vdwg.mxu0
        %562 = vmatprep.subr.mxu0 0.0
        %563 = vmatpush1.xpose.msra.mxu0 %v203
        %564 = vmatprep.subr.mxu0 0.0
        %565 = vmatpush1.xpose.msra.mxu0 %v204
        %566 = vmatprep.subr.mxu0 0.0
        %567 = vmatpush1.xpose.msra.mxu0 0.0
        %568 = vmatprep.subr.mxu0 0.0
        %569 = vmatpush1.xpose.msra.mxu0 0.0
        %570 = vmatprep.subr.mxu0 0.0
        %571 = vmatpush1.xpose.msra.mxu0 0.0
        %572 = vmatprep.subr.mxu0 0.0
        %573 = vmatpush1.xpose.msra.mxu0 0.0
        %574 = vmatprep.subr.mxu0 0.0
        %575 = vmatpush1.xpose.msra.mxu0 0.0
        %576 = vmatprep.subr.mxu0 0.0
        %577 = vmatpush1.xpose.msra.mxu0 0.0
        %578 = vmatprep.subr.mxu0 0.0
        %579 = vmatpush1.xpose.msra.mxu0 0.0
        %580 = vmatprep.subr.mxu0 0.0
        %581 = vmatpush1.xpose.msra.mxu0 0.0
        %582 = vmatprep.subr.mxu0 0.0
        %583 = vmatpush1.xpose.msra.mxu0 0.0
        %584 = vmatprep.subr.mxu0 0.0
        %585 = vmatpush1.xpose.msra.mxu0 0.0
        %586 = vmatprep.subr.mxu0 0.0
        %587 = vmatpush1.xpose.msra.mxu0 0.0
        %588 = vmatprep.subr.mxu0 0.0
        %589 = vmatpush1.xpose.msra.mxu0 0.0
        %590 = vmatprep.subr.mxu0 0.0
        %591 = vmatpush1.xpose.msra.mxu0 0.0
        %592 = vmatprep.subr.mxu0 0.0
        %593 = vmatpush1.xpose.msra.mxu0 0.0
        %594 = vmatprep.subr.mxu0 0.0
        %595 = vmatpush1.xpose.msra.mxu0 0.0
        %596 = vmatprep.subr.mxu0 0.0
        %597 = vmatpush1.xpose.msra.mxu0 0.0
        %598 = vmatprep.subr.mxu0 0.0
        %599 = vmatpush1.xpose.msra.mxu0 0.0
        %600 = vmatprep.subr.mxu0 0.0
        %601 = vmatpush1.xpose.msra.mxu0 0.0
        %602 = vmatprep.subr.mxu0 0.0
        %603 = vmatpush1.xpose.msra.mxu0 0.0
        %604 = vmatprep.subr.mxu0 0.0
        %605 = vmatpush1.xpose.msra.mxu0 0.0
        %606 = vmatprep.subr.mxu0 0.0
        %607 = vmatpush1.xpose.msra.mxu0 0.0
        %608 = vmatprep.subr.mxu0 0.0
        %609 = vmatpush1.xpose.msra.mxu0 0.0
        %610 = vmatprep.subr.mxu0 0.0
        %611 = vmatpush1.xpose.msra.mxu0 0.0
        %612 = vmatprep.subr.mxu0 0.0
        %613 = vmatpush1.xpose.msra.mxu0 0.0
        %614 = vmatprep.subr.mxu0 0.0
        %615 = vmatpush1.xpose.msra.mxu0 0.0
        %616 = vmatprep.subr.mxu0 0.0
        %617 = vmatpush1.xpose.msra.mxu0 0.0
        %618 = vmatprep.subr.mxu0 0.0
        %619 = vmatpush1.xpose.msra.mxu0 0.0
        %620 = vmatprep.subr.mxu0 0.0
        %621 = vmatpush1.xpose.msra.mxu0 0.0
        %622 = vmatprep.subr.mxu0 0.0
        %623 = vmatpush1.xpose.msra.mxu0 0.0
        %624 = vmatprep.subr.mxu0 0.0
        %625 = vmatpush1.xpose.msra.mxu0 0.0
        %626 = vmatprep.mubr.f32.mxu0 0.0
        %627 = vmatmul.mubr.f32.gmra.mrb[0].mxu0 %v209
        %v628 = vpop.f32.mrb[0].mxu0
        %v629 = vadd.f32 %v211, %v628
        %v630 = vpop.f32.mrb[0].mxu0
        %631 = vdwg.mxu0
        %632 = vmatprep.subr.mxu0 0.0
        %633 = vmatpush1.xpose.msra.mxu0 %v205
        %634 = vmatprep.subr.mxu0 0.0
        %635 = vmatpush1.xpose.msra.mxu0 %v206
        %636 = vmatprep.subr.mxu0 0.0
        %637 = vmatpush1.xpose.msra.mxu0 0.0
        %638 = vmatprep.subr.mxu0 0.0
        %639 = vmatpush1.xpose.msra.mxu0 0.0
        %640 = vmatprep.subr.mxu0 0.0
        %641 = vmatpush1.xpose.msra.mxu0 0.0
        %642 = vmatprep.subr.mxu0 0.0
        %643 = vmatpush1.xpose.msra.mxu0 0.0
        %644 = vmatprep.subr.mxu0 0.0
        %645 = vmatpush1.xpose.msra.mxu0 0.0
        %646 = vmatprep.subr.mxu0 0.0
        %647 = vmatpush1.xpose.msra.mxu0 0.0
        %648 = vmatprep.subr.mxu0 0.0
        %649 = vmatpush1.xpose.msra.mxu0 0.0
        %650 = vmatprep.subr.mxu0 0.0
        %651 = vmatpush1.xpose.msra.mxu0 0.0
        %652 = vmatprep.subr.mxu0 0.0
        %653 = vmatpush1.xpose.msra.mxu0 0.0
        %654 = vmatprep.subr.mxu0 0.0
        %655 = vmatpush1.xpose.msra.mxu0 0.0
        %656 = vmatprep.subr.mxu0 0.0
        %657 = vmatpush1.xpose.msra.mxu0 0.0
        %658 = vmatprep.subr.mxu0 0.0
        %659 = vmatpush1.xpose.msra.mxu0 0.0
        %660 = vmatprep.subr.mxu0 0.0
        %661 = vmatpush1.xpose.msra.mxu0 0.0
        %662 = vmatprep.subr.mxu0 0.0
        %663 = vmatpush1.xpose.msra.mxu0 0.0
        %664 = vmatprep.subr.mxu0 0.0
        %665 = vmatpush1.xpose.msra.mxu0 0.0
        %666 = vmatprep.subr.mxu0 0.0
        %667 = vmatpush1.xpose.msra.mxu0 0.0
        %668 = vmatprep.subr.mxu0 0.0
        %669 = vmatpush1.xpose.msra.mxu0 0.0
        %670 = vmatprep.subr.mxu0 0.0
        %671 = vmatpush1.xpose.msra.mxu0 0.0
        %672 = vmatprep.subr.mxu0 0.0
        %673 = vmatpush1.xpose.msra.mxu0 0.0
        %674 = vmatprep.subr.mxu0 0.0
        %675 = vmatpush1.xpose.msra.mxu0 0.0
        %676 = vmatprep.subr.mxu0 0.0
        %677 = vmatpush1.xpose.msra.mxu0 0.0
        %678 = vmatprep.subr.mxu0 0.0
        %679 = vmatpush1.xpose.msra.mxu0 0.0
        %680 = vmatprep.subr.mxu0 0.0
        %681 = vmatpush1.xpose.msra.mxu0 0.0
        %682 = vmatprep.subr.mxu0 0.0
        %683 = vmatpush1.xpose.msra.mxu0 0.0
        %684 = vmatprep.subr.mxu0 0.0
        %685 = vmatpush1.xpose.msra.mxu0 0.0
        %686 = vmatprep.subr.mxu0 0.0
        %687 = vmatpush1.xpose.msra.mxu0 0.0
        %688 = vmatprep.subr.mxu0 0.0
        %689 = vmatpush1.xpose.msra.mxu0 0.0
        %690 = vmatprep.subr.mxu0 0.0
        %691 = vmatpush1.xpose.msra.mxu0 0.0
        %692 = vmatprep.subr.mxu0 0.0
        %693 = vmatpush1.xpose.msra.mxu0 0.0
        %694 = vmatprep.subr.mxu0 0.0
        %695 = vmatpush1.xpose.msra.mxu0 0.0
        %696 = vmatprep.mubr.f32.mxu0 0.0
        %697 = vmatmul.mubr.f32.gmra.mrb[0].mxu0 %v209
        %v698 = vpop.f32.mrb[0].mxu0
        %v699 = vadd.f32 %v211, %v698
        %v700 = vpop.f32.mrb[0].mxu0
        %701 = vdwg.mxu0
        %702 = vmatprep.subr.mxu0 0.0
        %703 = vmatpush1.xpose.msra.mxu0 %v207
        %704 = vmatprep.subr.mxu0 0.0
        %705 = vmatpush1.xpose.msra.mxu0 %v208
        %706 = vmatprep.subr.mxu0 0.0
        %707 = vmatpush1.xpose.msra.mxu0 0.0
        %708 = vmatprep.subr.mxu0 0.0
        %709 = vmatpush1.xpose.msra.mxu0 0.0
        %710 = vmatprep.subr.mxu0 0.0
        %711 = vmatpush1.xpose.msra.mxu0 0.0
        %712 = vmatprep.subr.mxu0 0.0
        %713 = vmatpush1.xpose.msra.mxu0 0.0
        %714 = vmatprep.subr.mxu0 0.0
        %715 = vmatpush1.xpose.msra.mxu0 0.0
        %716 = vmatprep.subr.mxu0 0.0
        %717 = vmatpush1.xpose.msra.mxu0 0.0
        %718 = vmatprep.subr.mxu0 0.0
        %719 = vmatpush1.xpose.msra.mxu0 0.0
        %720 = vmatprep.subr.mxu0 0.0
        %721 = vmatpush1.xpose.msra.mxu0 0.0
        %722 = vmatprep.subr.mxu0 0.0
        %723 = vmatpush1.xpose.msra.mxu0 0.0
        %724 = vmatprep.subr.mxu0 0.0
        %725 = vmatpush1.xpose.msra.mxu0 0.0
        %726 = vmatprep.subr.mxu0 0.0
        %727 = vmatpush1.xpose.msra.mxu0 0.0
        %728 = vmatprep.subr.mxu0 0.0
        %729 = vmatpush1.xpose.msra.mxu0 0.0
        %730 = vmatprep.subr.mxu0 0.0
        %731 = vmatpush1.xpose.msra.mxu0 0.0
        %732 = vmatprep.subr.mxu0 0.0
        %733 = vmatpush1.xpose.msra.mxu0 0.0
        %734 = vmatprep.subr.mxu0 0.0
        %735 = vmatpush1.xpose.msra.mxu0 0.0
        %736 = vmatprep.subr.mxu0 0.0
        %737 = vmatpush1.xpose.msra.mxu0 0.0
        %738 = vmatprep.subr.mxu0 0.0
        %739 = vmatpush1.xpose.msra.mxu0 0.0
        %740 = vmatprep.subr.mxu0 0.0
        %741 = vmatpush1.xpose.msra.mxu0 0.0
        %742 = vmatprep.subr.mxu0 0.0
        %743 = vmatpush1.xpose.msra.mxu0 0.0
        %744 = vmatprep.subr.mxu0 0.0
        %745 = vmatpush1.xpose.msra.mxu0 0.0
        %746 = vmatprep.subr.mxu0 0.0
        %747 = vmatpush1.xpose.msra.mxu0 0.0
        %748 = vmatprep.subr.mxu0 0.0
        %749 = vmatpush1.xpose.msra.mxu0 0.0
        %750 = vmatprep.subr.mxu0 0.0
        %751 = vmatpush1.xpose.msra.mxu0 0.0
        %752 = vmatprep.subr.mxu0 0.0
        %753 = vmatpush1.xpose.msra.mxu0 0.0
        %754 = vmatprep.subr.mxu0 0.0
        %755 = vmatpush1.xpose.msra.mxu0 0.0
        %756 = vmatprep.subr.mxu0 0.0
        %757 = vmatpush1.xpose.msra.mxu0 0.0
        %758 = vmatprep.subr.mxu0 0.0
        %759 = vmatpush1.xpose.msra.mxu0 0.0
        %760 = vmatprep.subr.mxu0 0.0
        %761 = vmatpush1.xpose.msra.mxu0 0.0
        %762 = vmatprep.subr.mxu0 0.0
        %763 = vmatpush1.xpose.msra.mxu0 0.0
        %764 = vmatprep.subr.mxu0 0.0
        %765 = vmatpush1.xpose.msra.mxu0 0.0
        %766 = vmatprep.mubr.f32.mxu0 0.0
        %767 = vmatmul.mubr.f32.gmra.mrb[0].mxu0 %v209
        %v768 = vpop.f32.mrb[0].mxu0
        %v769 = vadd.f32 %v211, %v768
        %v770 = vpop.f32.mrb[0].mxu0
        %771 = vdwg.mxu0
        %vm772 = vcmask 122880
        %v773 = vsel %vm772, %v279, -inf
        %774 = vmax.xlane.f32.xlu0 %v773
        %v775 = vpop.xlane.xlu0 %774
        %v776 = vsel %vm772, %v349, -inf
        %777 = vmax.xlane.f32.xlu0 %v776
        %v778 = vpop.xlane.xlu0 %777
        %v779 = vsel %vm772, %v419, -inf
        %780 = vmax.xlane.f32.xlu0 %v779
        %v781 = vpop.xlane.xlu0 %780
        %v782 = vsel %vm772, %v489, -inf
        %783 = vmax.xlane.f32.xlu0 %v782
        %v784 = vpop.xlane.xlu0 %783
        %v785 = vsel %vm772, %v559, -inf
        %786 = vmax.xlane.f32.xlu0 %v785
        %v787 = vpop.xlane.xlu0 %786
        %v788 = vsel %vm772, %v629, -inf
        %789 = vmax.xlane.f32.xlu0 %v788
        %v790 = vpop.xlane.xlu0 %789
        %v791 = vsel %vm772, %v699, -inf
        %792 = vmax.xlane.f32.xlu0 %v791
        %v793 = vpop.xlane.xlu0 %792
        %v794 = vsel %vm772, %v769, -inf
        %795 = vmax.xlane.f32.xlu0 %v794
        %v796 = vpop.xlane.xlu0 %795
        %v797 = vsub.f32 %v279, %v775
        %v798 = vsub.f32 %v349, %v778
        %v799 = vsub.f32 %v419, %v781
        %v800 = vsub.f32 %v489, %v784
        %v801 = vsub.f32 %v559, %v787
        %v802 = vsub.f32 %v629, %v790
        %v803 = vsub.f32 %v699, %v793
        %v804 = vsub.f32 %v769, %v796
        %v805 = vmul.f32 %v797, 1.442695
        %v806 = vpow.pop %v805
        %v807 = vmul.f32 %v798, 1.442695
        %v808 = vpow.pop %v807
        %v809 = vmul.f32 %v799, 1.442695
        %v810 = vpow.pop %v809
        %v811 = vmul.f32 %v800, 1.442695
        %v812 = vpow.pop %v811
        %v813 = vmul.f32 %v801, 1.442695
        %v814 = vpow.pop %v813
        %v815 = vmul.f32 %v802, 1.442695
        %v816 = vpow.pop %v815
        %v817 = vmul.f32 %v803, 1.442695
        %v818 = vpow.pop %v817
        %v819 = vmul.f32 %v804, 1.442695
        %v820 = vpow.pop %v819
        %v821 = vsel %vm772, %v806, 0.0
        %822 = vadd.xlane.f32.xlu0 %v821
        %v823 = vpop.xlane.xlu0 %822
        %v824 = vsel %vm772, %v808, 0.0
        %825 = vadd.xlane.f32.xlu0 %v824
        %v826 = vpop.xlane.xlu0 %825
        %v827 = vsel %vm772, %v810, 0.0
        %828 = vadd.xlane.f32.xlu0 %v827
        %v829 = vpop.xlane.xlu0 %828
        %v830 = vsel %vm772, %v812, 0.0
        %831 = vadd.xlane.f32.xlu0 %v830
        %v832 = vpop.xlane.xlu0 %831
        %v833 = vsel %vm772, %v814, 0.0
        %834 = vadd.xlane.f32.xlu0 %v833
        %v835 = vpop.xlane.xlu0 %834
        %v836 = vsel %vm772, %v816, 0.0
        %837 = vadd.xlane.f32.xlu0 %v836
        %v838 = vpop.xlane.xlu0 %837
        %v839 = vsel %vm772, %v818, 0.0
        %840 = vadd.xlane.f32.xlu0 %v839
        %v841 = vpop.xlane.xlu0 %840
        %v842 = vsel %vm772, %v820, 0.0
        %843 = vadd.xlane.f32.xlu0 %v842
        %v844 = vpop.xlane.xlu0 %843
        %v845 = vrcp.pop %v823
        %v846 = vrcp.pop %v826
        %v847 = vrcp.pop %v829
        %v848 = vrcp.pop %v832
        %v849 = vrcp.pop %v835
        %v850 = vrcp.pop %v838
        %v851 = vrcp.pop %v841
        %v852 = vrcp.pop %v844
        %v853 = vmul.f32 %v806, %v845
        %v854 = vmul.f32 %v808, %v846
        %v855 = vmul.f32 %v810, %v847
        %v856 = vmul.f32 %v812, %v848
        %v857 = vmul.f32 %v814, %v849
        %v858 = vmul.f32 %v816, %v850
        %v859 = vmul.f32 %v818, %v851
        %v860 = vmul.f32 %v820, %v852
        %vm861 = vcmask 130048
        %v863 = vsel %vm861, %v853, 0
        %865 = vmatprep.subr.mxu0 0.0
        %866 = vmatpush1.msra.mxu0 %v193
        %867 = vmatprep.subr.mxu0 0.0
        %868 = vmatpush1.msra.mxu0 %v194
        %869 = vmatprep.subr.mxu0 0.0
        %870 = vmatpush1.msra.mxu0 0.0
        %871 = vmatprep.subr.mxu0 0.0
        %872 = vmatpush1.msra.mxu0 0.0
        %873 = vmatprep.subr.mxu0 0.0
        %874 = vmatpush1.msra.mxu0 0.0
        %875 = vmatprep.subr.mxu0 0.0
        %876 = vmatpush1.msra.mxu0 0.0
        %877 = vmatprep.subr.mxu0 0.0
        %878 = vmatpush1.msra.mxu0 0.0
        %879 = vmatprep.subr.mxu0 0.0
        %880 = vmatpush1.msra.mxu0 0.0
        %881 = vmatprep.subr.mxu0 0.0
        %882 = vmatpush1.msra.mxu0 0.0
        %883 = vmatprep.subr.mxu0 0.0
        %884 = vmatpush1.msra.mxu0 0.0
        %885 = vmatprep.subr.mxu0 0.0
        %886 = vmatpush1.msra.mxu0 0.0
        %887 = vmatprep.subr.mxu0 0.0
        %888 = vmatpush1.msra.mxu0 0.0
        %889 = vmatprep.subr.mxu0 0.0
        %890 = vmatpush1.msra.mxu0 0.0
        %891 = vmatprep.subr.mxu0 0.0
        %892 = vmatpush1.msra.mxu0 0.0
        %893 = vmatprep.subr.mxu0 0.0
        %894 = vmatpush1.msra.mxu0 0.0
        %895 = vmatprep.subr.mxu0 0.0
        %896 = vmatpush1.msra.mxu0 0.0
        %897 = vmatprep.subr.mxu0 0.0
        %898 = vmatpush1.msra.mxu0 0.0
        %899 = vmatprep.subr.mxu0 0.0
        %900 = vmatpush1.msra.mxu0 0.0
        %901 = vmatprep.subr.mxu0 0.0
        %902 = vmatpush1.msra.mxu0 0.0
        %903 = vmatprep.subr.mxu0 0.0
        %904 = vmatpush1.msra.mxu0 0.0
        %905 = vmatprep.subr.mxu0 0.0
        %906 = vmatpush1.msra.mxu0 0.0
        %907 = vmatprep.subr.mxu0 0.0
        %908 = vmatpush1.msra.mxu0 0.0
        %909 = vmatprep.subr.mxu0 0.0
        %910 = vmatpush1.msra.mxu0 0.0
        %911 = vmatprep.subr.mxu0 0.0
        %912 = vmatpush1.msra.mxu0 0.0
        %913 = vmatprep.subr.mxu0 0.0
        %914 = vmatpush1.msra.mxu0 0.0
        %915 = vmatprep.subr.mxu0 0.0
        %916 = vmatpush1.msra.mxu0 0.0
        %917 = vmatprep.subr.mxu0 0.0
        %918 = vmatpush1.msra.mxu0 0.0
        %919 = vmatprep.subr.mxu0 0.0
        %920 = vmatpush1.msra.mxu0 0.0
        %921 = vmatprep.subr.mxu0 0.0
        %922 = vmatpush1.msra.mxu0 0.0
        %923 = vmatprep.subr.mxu0 0.0
        %924 = vmatpush1.msra.mxu0 0.0
        %925 = vmatprep.subr.mxu0 0.0
        %926 = vmatpush1.msra.mxu0 0.0
        %927 = vmatprep.subr.mxu0 0.0
        %928 = vmatpush1.msra.mxu0 0.0
        %929 = vmatprep.mubr.f32.mxu0 0.0
        %930 = vmatmul.mubr.f32.gmra.mrb[0].mxu0 %v863
        %v931 = vpop.f32.mrb[0].mxu0
        %v932 = vadd.f32 0.0, %v931
        %v933 = vpop.f32.mrb[0].mxu0
        %934 = vdwg.mxu0
        %v936 = vsel %vm861, %v854, 0
        %938 = vmatprep.subr.mxu0 0.0
        %939 = vmatpush1.msra.mxu0 %v195
        %940 = vmatprep.subr.mxu0 0.0
        %941 = vmatpush1.msra.mxu0 %v196
        %942 = vmatprep.subr.mxu0 0.0
        %943 = vmatpush1.msra.mxu0 0.0
        %944 = vmatprep.subr.mxu0 0.0
        %945 = vmatpush1.msra.mxu0 0.0
        %946 = vmatprep.subr.mxu0 0.0
        %947 = vmatpush1.msra.mxu0 0.0
        %948 = vmatprep.subr.mxu0 0.0
        %949 = vmatpush1.msra.mxu0 0.0
        %950 = vmatprep.subr.mxu0 0.0
        %951 = vmatpush1.msra.mxu0 0.0
        %952 = vmatprep.subr.mxu0 0.0
        %953 = vmatpush1.msra.mxu0 0.0
        %954 = vmatprep.subr.mxu0 0.0
        %955 = vmatpush1.msra.mxu0 0.0
        %956 = vmatprep.subr.mxu0 0.0
        %957 = vmatpush1.msra.mxu0 0.0
        %958 = vmatprep.subr.mxu0 0.0
        %959 = vmatpush1.msra.mxu0 0.0
        %960 = vmatprep.subr.mxu0 0.0
        %961 = vmatpush1.msra.mxu0 0.0
        %962 = vmatprep.subr.mxu0 0.0
        %963 = vmatpush1.msra.mxu0 0.0
        %964 = vmatprep.subr.mxu0 0.0
        %965 = vmatpush1.msra.mxu0 0.0
        %966 = vmatprep.subr.mxu0 0.0
        %967 = vmatpush1.msra.mxu0 0.0
        %968 = vmatprep.subr.mxu0 0.0
        %969 = vmatpush1.msra.mxu0 0.0
        %970 = vmatprep.subr.mxu0 0.0
        %971 = vmatpush1.msra.mxu0 0.0
        %972 = vmatprep.subr.mxu0 0.0
        %973 = vmatpush1.msra.mxu0 0.0
        %974 = vmatprep.subr.mxu0 0.0
        %975 = vmatpush1.msra.mxu0 0.0
        %976 = vmatprep.subr.mxu0 0.0
        %977 = vmatpush1.msra.mxu0 0.0
        %978 = vmatprep.subr.mxu0 0.0
        %979 = vmatpush1.msra.mxu0 0.0
        %980 = vmatprep.subr.mxu0 0.0
        %981 = vmatpush1.msra.mxu0 0.0
        %982 = vmatprep.subr.mxu0 0.0
        %983 = vmatpush1.msra.mxu0 0.0
        %984 = vmatprep.subr.mxu0 0.0
        %985 = vmatpush1.msra.mxu0 0.0
        %986 = vmatprep.subr.mxu0 0.0
        %987 = vmatpush1.msra.mxu0 0.0
        %988 = vmatprep.subr.mxu0 0.0
        %989 = vmatpush1.msra.mxu0 0.0
        %990 = vmatprep.subr.mxu0 0.0
        %991 = vmatpush1.msra.mxu0 0.0
        %992 = vmatprep.subr.mxu0 0.0
        %993 = vmatpush1.msra.mxu0 0.0
        %994 = vmatprep.subr.mxu0 0.0
        %995 = vmatpush1.msra.mxu0 0.0
        %996 = vmatprep.subr.mxu0 0.0
        %997 = vmatpush1.msra.mxu0 0.0
        %998 = vmatprep.subr.mxu0 0.0
        %999 = vmatpush1.msra.mxu0 0.0
        %1000 = vmatprep.subr.mxu0 0.0
        %1001 = vmatpush1.msra.mxu0 0.0
        %1002 = vmatprep.mubr.f32.mxu0 0.0
        %1003 = vmatmul.mubr.f32.gmra.mrb[0].mxu0 %v936
        %v1004 = vpop.f32.mrb[0].mxu0
        %v1005 = vadd.f32 0.0, %v1004
        %v1006 = vpop.f32.mrb[0].mxu0
        %1007 = vdwg.mxu0
        %v1009 = vsel %vm861, %v855, 0
        %1011 = vmatprep.subr.mxu0 0.0
        %1012 = vmatpush1.msra.mxu0 %v197
        %1013 = vmatprep.subr.mxu0 0.0
        %1014 = vmatpush1.msra.mxu0 %v198
        %1015 = vmatprep.subr.mxu0 0.0
        %1016 = vmatpush1.msra.mxu0 0.0
        %1017 = vmatprep.subr.mxu0 0.0
        %1018 = vmatpush1.msra.mxu0 0.0
        %1019 = vmatprep.subr.mxu0 0.0
        %1020 = vmatpush1.msra.mxu0 0.0
        %1021 = vmatprep.subr.mxu0 0.0
        %1022 = vmatpush1.msra.mxu0 0.0
        %1023 = vmatprep.subr.mxu0 0.0
        %1024 = vmatpush1.msra.mxu0 0.0
        %1025 = vmatprep.subr.mxu0 0.0
        %1026 = vmatpush1.msra.mxu0 0.0
        %1027 = vmatprep.subr.mxu0 0.0
        %1028 = vmatpush1.msra.mxu0 0.0
        %1029 = vmatprep.subr.mxu0 0.0
        %1030 = vmatpush1.msra.mxu0 0.0
        %1031 = vmatprep.subr.mxu0 0.0
        %1032 = vmatpush1.msra.mxu0 0.0
        %1033 = vmatprep.subr.mxu0 0.0
        %1034 = vmatpush1.msra.mxu0 0.0
        %1035 = vmatprep.subr.mxu0 0.0
        %1036 = vmatpush1.msra.mxu0 0.0
        %1037 = vmatprep.subr.mxu0 0.0
        %1038 = vmatpush1.msra.mxu0 0.0
        %1039 = vmatprep.subr.mxu0 0.0
        %1040 = vmatpush1.msra.mxu0 0.0
        %1041 = vmatprep.subr.mxu0 0.0
        %1042 = vmatpush1.msra.mxu0 0.0
        %1043 = vmatprep.subr.mxu0 0.0
        %1044 = vmatpush1.msra.mxu0 0.0
        %1045 = vmatprep.subr.mxu0 0.0
        %1046 = vmatpush1.msra.mxu0 0.0
        %1047 = vmatprep.subr.mxu0 0.0
        %1048 = vmatpush1.msra.mxu0 0.0
        %1049 = vmatprep.subr.mxu0 0.0
        %1050 = vmatpush1.msra.mxu0 0.0
        %1051 = vmatprep.subr.mxu0 0.0
        %1052 = vmatpush1.msra.mxu0 0.0
        %1053 = vmatprep.subr.mxu0 0.0
        %1054 = vmatpush1.msra.mxu0 0.0
        %1055 = vmatprep.subr.mxu0 0.0
        %1056 = vmatpush1.msra.mxu0 0.0
        %1057 = vmatprep.subr.mxu0 0.0
        %1058 = vmatpush1.msra.mxu0 0.0
        %1059 = vmatprep.subr.mxu0 0.0
        %1060 = vmatpush1.msra.mxu0 0.0
        %1061 = vmatprep.subr.mxu0 0.0
        %1062 = vmatpush1.msra.mxu0 0.0
        %1063 = vmatprep.subr.mxu0 0.0
        %1064 = vmatpush1.msra.mxu0 0.0
        %1065 = vmatprep.subr.mxu0 0.0
        %1066 = vmatpush1.msra.mxu0 0.0
        %1067 = vmatprep.subr.mxu0 0.0
        %1068 = vmatpush1.msra.mxu0 0.0
        %1069 = vmatprep.subr.mxu0 0.0
        %1070 = vmatpush1.msra.mxu0 0.0
        %1071 = vmatprep.subr.mxu0 0.0
        %1072 = vmatpush1.msra.mxu0 0.0
        %1073 = vmatprep.subr.mxu0 0.0
        %1074 = vmatpush1.msra.mxu0 0.0
        %1075 = vmatprep.mubr.f32.mxu0 0.0
        %1076 = vmatmul.mubr.f32.gmra.mrb[0].mxu0 %v1009
        %v1077 = vpop.f32.mrb[0].mxu0
        %v1078 = vadd.f32 0.0, %v1077
        %v1079 = vpop.f32.mrb[0].mxu0
        %1080 = vdwg.mxu0
        %v1082 = vsel %vm861, %v856, 0
        %1084 = vmatprep.subr.mxu0 0.0
        %1085 = vmatpush1.msra.mxu0 %v199
        %1086 = vmatprep.subr.mxu0 0.0
        %1087 = vmatpush1.msra.mxu0 %v200
        %1088 = vmatprep.subr.mxu0 0.0
        %1089 = vmatpush1.msra.mxu0 0.0
        %1090 = vmatprep.subr.mxu0 0.0
        %1091 = vmatpush1.msra.mxu0 0.0
        %1092 = vmatprep.subr.mxu0 0.0
        %1093 = vmatpush1.msra.mxu0 0.0
        %1094 = vmatprep.subr.mxu0 0.0
        %1095 = vmatpush1.msra.mxu0 0.0
        %1096 = vmatprep.subr.mxu0 0.0
        %1097 = vmatpush1.msra.mxu0 0.0
        %1098 = vmatprep.subr.mxu0 0.0
        %1099 = vmatpush1.msra.mxu0 0.0
        %1100 = vmatprep.subr.mxu0 0.0
        %1101 = vmatpush1.msra.mxu0 0.0
        %1102 = vmatprep.subr.mxu0 0.0
        %1103 = vmatpush1.msra.mxu0 0.0
        %1104 = vmatprep.subr.mxu0 0.0
        %1105 = vmatpush1.msra.mxu0 0.0
        %1106 = vmatprep.subr.mxu0 0.0
        %1107 = vmatpush1.msra.mxu0 0.0
        %1108 = vmatprep.subr.mxu0 0.0
        %1109 = vmatpush1.msra.mxu0 0.0
        %1110 = vmatprep.subr.mxu0 0.0
        %1111 = vmatpush1.msra.mxu0 0.0
        %1112 = vmatprep.subr.mxu0 0.0
        %1113 = vmatpush1.msra.mxu0 0.0
        %1114 = vmatprep.subr.mxu0 0.0
        %1115 = vmatpush1.msra.mxu0 0.0
        %1116 = vmatprep.subr.mxu0 0.0
        %1117 = vmatpush1.msra.mxu0 0.0
        %1118 = vmatprep.subr.mxu0 0.0
        %1119 = vmatpush1.msra.mxu0 0.0
        %1120 = vmatprep.subr.mxu0 0.0
        %1121 = vmatpush1.msra.mxu0 0.0
        %1122 = vmatprep.subr.mxu0 0.0
        %1123 = vmatpush1.msra.mxu0 0.0
        %1124 = vmatprep.subr.mxu0 0.0
        %1125 = vmatpush1.msra.mxu0 0.0
        %1126 = vmatprep.subr.mxu0 0.0
        %1127 = vmatpush1.msra.mxu0 0.0
        %1128 = vmatprep.subr.mxu0 0.0
        %1129 = vmatpush1.msra.mxu0 0.0
        %1130 = vmatprep.subr.mxu0 0.0
        %1131 = vmatpush1.msra.mxu0 0.0
        %1132 = vmatprep.subr.mxu0 0.0
        %1133 = vmatpush1.msra.mxu0 0.0
        %1134 = vmatprep.subr.mxu0 0.0
        %1135 = vmatpush1.msra.mxu0 0.0
        %1136 = vmatprep.subr.mxu0 0.0
        %1137 = vmatpush1.msra.mxu0 0.0
        %1138 = vmatprep.subr.mxu0 0.0
        %1139 = vmatpush1.msra.mxu0 0.0
        %1140 = vmatprep.subr.mxu0 0.0
        %1141 = vmatpush1.msra.mxu0 0.0
        %1142 = vmatprep.subr.mxu0 0.0
        %1143 = vmatpush1.msra.mxu0 0.0
        %1144 = vmatprep.subr.mxu0 0.0
        %1145 = vmatpush1.msra.mxu0 0.0
        %1146 = vmatprep.subr.mxu0 0.0
        %1147 = vmatpush1.msra.mxu0 0.0
        %1148 = vmatprep.mubr.f32.mxu0 0.0
        %1149 = vmatmul.mubr.f32.gmra.mrb[0].mxu0 %v1082
        %v1150 = vpop.f32.mrb[0].mxu0
        %v1151 = vadd.f32 0.0, %v1150
        %v1152 = vpop.f32.mrb[0].mxu0
        %1153 = vdwg.mxu0
        %v1155 = vsel %vm861, %v857, 0
        %1157 = vmatprep.subr.mxu0 0.0
        %1158 = vmatpush1.msra.mxu0 %v201
        %1159 = vmatprep.subr.mxu0 0.0
        %1160 = vmatpush1.msra.mxu0 %v202
        %1161 = vmatprep.subr.mxu0 0.0
        %1162 = vmatpush1.msra.mxu0 0.0
        %1163 = vmatprep.subr.mxu0 0.0
        %1164 = vmatpush1.msra.mxu0 0.0
        %1165 = vmatprep.subr.mxu0 0.0
        %1166 = vmatpush1.msra.mxu0 0.0
        %1167 = vmatprep.subr.mxu0 0.0
        %1168 = vmatpush1.msra.mxu0 0.0
        %1169 = vmatprep.subr.mxu0 0.0
        %1170 = vmatpush1.msra.mxu0 0.0
        %1171 = vmatprep.subr.mxu0 0.0
        %1172 = vmatpush1.msra.mxu0 0.0
        %1173 = vmatprep.subr.mxu0 0.0
        %1174 = vmatpush1.msra.mxu0 0.0
        %1175 = vmatprep.subr.mxu0 0.0
        %1176 = vmatpush1.msra.mxu0 0.0
        %1177 = vmatprep.subr.mxu0 0.0
        %1178 = vmatpush1.msra.mxu0 0.0
        %1179 = vmatprep.subr.mxu0 0.0
        %1180 = vmatpush1.msra.mxu0 0.0
        %1181 = vmatprep.subr.mxu0 0.0
        %1182 = vmatpush1.msra.mxu0 0.0
        %1183 = vmatprep.subr.mxu0 0.0
        %1184 = vmatpush1.msra.mxu0 0.0
        %1185 = vmatprep.subr.mxu0 0.0
        %1186 = vmatpush1.msra.mxu0 0.0
        %1187 = vmatprep.subr.mxu0 0.0
        %1188 = vmatpush1.msra.mxu0 0.0
        %1189 = vmatprep.subr.mxu0 0.0
        %1190 = vmatpush1.msra.mxu0 0.0
        %1191 = vmatprep.subr.mxu0 0.0
        %1192 = vmatpush1.msra.mxu0 0.0
        %1193 = vmatprep.subr.mxu0 0.0
        %1194 = vmatpush1.msra.mxu0 0.0
        %1195 = vmatprep.subr.mxu0 0.0
        %1196 = vmatpush1.msra.mxu0 0.0
        %1197 = vmatprep.subr.mxu0 0.0
        %1198 = vmatpush1.msra.mxu0 0.0
        %1199 = vmatprep.subr.mxu0 0.0
        %1200 = vmatpush1.msra.mxu0 0.0
        %1201 = vmatprep.subr.mxu0 0.0
        %1202 = vmatpush1.msra.mxu0 0.0
        %1203 = vmatprep.subr.mxu0 0.0
        %1204 = vmatpush1.msra.mxu0 0.0
        %1205 = vmatprep.subr.mxu0 0.0
        %1206 = vmatpush1.msra.mxu0 0.0
        %1207 = vmatprep.subr.mxu0 0.0
        %1208 = vmatpush1.msra.mxu0 0.0
        %1209 = vmatprep.subr.mxu0 0.0
        %1210 = vmatpush1.msra.mxu0 0.0
        %1211 = vmatprep.subr.mxu0 0.0
        %1212 = vmatpush1.msra.mxu0 0.0
        %1213 = vmatprep.subr.mxu0 0.0
        %1214 = vmatpush1.msra.mxu0 0.0
        %1215 = vmatprep.subr.mxu0 0.0
        %1216 = vmatpush1.msra.mxu0 0.0
        %1217 = vmatprep.subr.mxu0 0.0
        %1218 = vmatpush1.msra.mxu0 0.0
        %1219 = vmatprep.subr.mxu0 0.0
        %1220 = vmatpush1.msra.mxu0 0.0
        %1221 = vmatprep.mubr.f32.mxu0 0.0
        %1222 = vmatmul.mubr.f32.gmra.mrb[0].mxu0 %v1155
        %v1223 = vpop.f32.mrb[0].mxu0
        %v1224 = vadd.f32 0.0, %v1223
        %v1225 = vpop.f32.mrb[0].mxu0
        %1226 = vdwg.mxu0
        %v1228 = vsel %vm861, %v858, 0
        %1230 = vmatprep.subr.mxu0 0.0
        %1231 = vmatpush1.msra.mxu0 %v203
        %1232 = vmatprep.subr.mxu0 0.0
        %1233 = vmatpush1.msra.mxu0 %v204
        %1234 = vmatprep.subr.mxu0 0.0
        %1235 = vmatpush1.msra.mxu0 0.0
        %1236 = vmatprep.subr.mxu0 0.0
        %1237 = vmatpush1.msra.mxu0 0.0
        %1238 = vmatprep.subr.mxu0 0.0
        %1239 = vmatpush1.msra.mxu0 0.0
        %1240 = vmatprep.subr.mxu0 0.0
        %1241 = vmatpush1.msra.mxu0 0.0
        %1242 = vmatprep.subr.mxu0 0.0
        %1243 = vmatpush1.msra.mxu0 0.0
        %1244 = vmatprep.subr.mxu0 0.0
        %1245 = vmatpush1.msra.mxu0 0.0
        %1246 = vmatprep.subr.mxu0 0.0
        %1247 = vmatpush1.msra.mxu0 0.0
        %1248 = vmatprep.subr.mxu0 0.0
        %1249 = vmatpush1.msra.mxu0 0.0
        %1250 = vmatprep.subr.mxu0 0.0
        %1251 = vmatpush1.msra.mxu0 0.0
        %1252 = vmatprep.subr.mxu0 0.0
        %1253 = vmatpush1.msra.mxu0 0.0
        %1254 = vmatprep.subr.mxu0 0.0
        %1255 = vmatpush1.msra.mxu0 0.0
        %1256 = vmatprep.subr.mxu0 0.0
        %1257 = vmatpush1.msra.mxu0 0.0
        %1258 = vmatprep.subr.mxu0 0.0
        %1259 = vmatpush1.msra.mxu0 0.0
        %1260 = vmatprep.subr.mxu0 0.0
        %1261 = vmatpush1.msra.mxu0 0.0
        %1262 = vmatprep.subr.mxu0 0.0
        %1263 = vmatpush1.msra.mxu0 0.0
        %1264 = vmatprep.subr.mxu0 0.0
        %1265 = vmatpush1.msra.mxu0 0.0
        %1266 = vmatprep.subr.mxu0 0.0
        %1267 = vmatpush1.msra.mxu0 0.0
        %1268 = vmatprep.subr.mxu0 0.0
        %1269 = vmatpush1.msra.mxu0 0.0
        %1270 = vmatprep.subr.mxu0 0.0
        %1271 = vmatpush1.msra.mxu0 0.0
        %1272 = vmatprep.subr.mxu0 0.0
        %1273 = vmatpush1.msra.mxu0 0.0
        %1274 = vmatprep.subr.mxu0 0.0
        %1275 = vmatpush1.msra.mxu0 0.0
        %1276 = vmatprep.subr.mxu0 0.0
        %1277 = vmatpush1.msra.mxu0 0.0
        %1278 = vmatprep.subr.mxu0 0.0
        %1279 = vmatpush1.msra.mxu0 0.0
        %1280 = vmatprep.subr.mxu0 0.0
        %1281 = vmatpush1.msra.mxu0 0.0
        %1282 = vmatprep.subr.mxu0 0.0
        %1283 = vmatpush1.msra.mxu0 0.0
        %1284 = vmatprep.subr.mxu0 0.0
        %1285 = vmatpush1.msra.mxu0 0.0
        %1286 = vmatprep.subr.mxu0 0.0
        %1287 = vmatpush1.msra.mxu0 0.0
        %1288 = vmatprep.subr.mxu0 0.0
        %1289 = vmatpush1.msra.mxu0 0.0
        %1290 = vmatprep.subr.mxu0 0.0
        %1291 = vmatpush1.msra.mxu0 0.0
        %1292 = vmatprep.subr.mxu0 0.0
        %1293 = vmatpush1.msra.mxu0 0.0
        %1294 = vmatprep.mubr.f32.mxu0 0.0
        %1295 = vmatmul.mubr.f32.gmra.mrb[0].mxu0 %v1228
        %v1296 = vpop.f32.mrb[0].mxu0
        %v1297 = vadd.f32 0.0, %v1296
        %v1298 = vpop.f32.mrb[0].mxu0
        %1299 = vdwg.mxu0
        %v1301 = vsel %vm861, %v859, 0
        %1303 = vmatprep.subr.mxu0 0.0
        %1304 = vmatpush1.msra.mxu0 %v205
        %1305 = vmatprep.subr.mxu0 0.0
        %1306 = vmatpush1.msra.mxu0 %v206
        %1307 = vmatprep.subr.mxu0 0.0
        %1308 = vmatpush1.msra.mxu0 0.0
        %1309 = vmatprep.subr.mxu0 0.0
        %1310 = vmatpush1.msra.mxu0 0.0
        %1311 = vmatprep.subr.mxu0 0.0
        %1312 = vmatpush1.msra.mxu0 0.0
        %1313 = vmatprep.subr.mxu0 0.0
        %1314 = vmatpush1.msra.mxu0 0.0
        %1315 = vmatprep.subr.mxu0 0.0
        %1316 = vmatpush1.msra.mxu0 0.0
        %1317 = vmatprep.subr.mxu0 0.0
        %1318 = vmatpush1.msra.mxu0 0.0
        %1319 = vmatprep.subr.mxu0 0.0
        %1320 = vmatpush1.msra.mxu0 0.0
        %1321 = vmatprep.subr.mxu0 0.0
        %1322 = vmatpush1.msra.mxu0 0.0
        %1323 = vmatprep.subr.mxu0 0.0
        %1324 = vmatpush1.msra.mxu0 0.0
        %1325 = vmatprep.subr.mxu0 0.0
        %1326 = vmatpush1.msra.mxu0 0.0
        %1327 = vmatprep.subr.mxu0 0.0
        %1328 = vmatpush1.msra.mxu0 0.0
        %1329 = vmatprep.subr.mxu0 0.0
        %1330 = vmatpush1.msra.mxu0 0.0
        %1331 = vmatprep.subr.mxu0 0.0
        %1332 = vmatpush1.msra.mxu0 0.0
        %1333 = vmatprep.subr.mxu0 0.0
        %1334 = vmatpush1.msra.mxu0 0.0
        %1335 = vmatprep.subr.mxu0 0.0
        %1336 = vmatpush1.msra.mxu0 0.0
        %1337 = vmatprep.subr.mxu0 0.0
        %1338 = vmatpush1.msra.mxu0 0.0
        %1339 = vmatprep.subr.mxu0 0.0
        %1340 = vmatpush1.msra.mxu0 0.0
        %1341 = vmatprep.subr.mxu0 0.0
        %1342 = vmatpush1.msra.mxu0 0.0
        %1343 = vmatprep.subr.mxu0 0.0
        %1344 = vmatpush1.msra.mxu0 0.0
        %1345 = vmatprep.subr.mxu0 0.0
        %1346 = vmatpush1.msra.mxu0 0.0
        %1347 = vmatprep.subr.mxu0 0.0
        %1348 = vmatpush1.msra.mxu0 0.0
        %1349 = vmatprep.subr.mxu0 0.0
        %1350 = vmatpush1.msra.mxu0 0.0
        %1351 = vmatprep.subr.mxu0 0.0
        %1352 = vmatpush1.msra.mxu0 0.0
        %1353 = vmatprep.subr.mxu0 0.0
        %1354 = vmatpush1.msra.mxu0 0.0
        %1355 = vmatprep.subr.mxu0 0.0
        %1356 = vmatpush1.msra.mxu0 0.0
        %1357 = vmatprep.subr.mxu0 0.0
        %1358 = vmatpush1.msra.mxu0 0.0
        %1359 = vmatprep.subr.mxu0 0.0
        %1360 = vmatpush1.msra.mxu0 0.0
        %1361 = vmatprep.subr.mxu0 0.0
        %1362 = vmatpush1.msra.mxu0 0.0
        %1363 = vmatprep.subr.mxu0 0.0
        %1364 = vmatpush1.msra.mxu0 0.0
        %1365 = vmatprep.subr.mxu0 0.0
        %1366 = vmatpush1.msra.mxu0 0.0
        %1367 = vmatprep.mubr.f32.mxu0 0.0
        %1368 = vmatmul.mubr.f32.gmra.mrb[0].mxu0 %v1301
        %v1369 = vpop.f32.mrb[0].mxu0
        %v1370 = vadd.f32 0.0, %v1369
        %v1371 = vpop.f32.mrb[0].mxu0
        %1372 = vdwg.mxu0
        %v1374 = vsel %vm861, %v860, 0
        %1376 = vmatprep.subr.mxu0 0.0
        %1377 = vmatpush1.msra.mxu0 %v207
        %1378 = vmatprep.subr.mxu0 0.0
        %1379 = vmatpush1.msra.mxu0 %v208
        %1380 = vmatprep.subr.mxu0 0.0
        %1381 = vmatpush1.msra.mxu0 0.0
        %1382 = vmatprep.subr.mxu0 0.0
        %1383 = vmatpush1.msra.mxu0 0.0
        %1384 = vmatprep.subr.mxu0 0.0
        %1385 = vmatpush1.msra.mxu0 0.0
        %1386 = vmatprep.subr.mxu0 0.0
        %1387 = vmatpush1.msra.mxu0 0.0
        %1388 = vmatprep.subr.mxu0 0.0
        %1389 = vmatpush1.msra.mxu0 0.0
        %1390 = vmatprep.subr.mxu0 0.0
        %1391 = vmatpush1.msra.mxu0 0.0
        %1392 = vmatprep.subr.mxu0 0.0
        %1393 = vmatpush1.msra.mxu0 0.0
        %1394 = vmatprep.subr.mxu0 0.0
        %1395 = vmatpush1.msra.mxu0 0.0
        %1396 = vmatprep.subr.mxu0 0.0
        %1397 = vmatpush1.msra.mxu0 0.0
        %1398 = vmatprep.subr.mxu0 0.0
        %1399 = vmatpush1.msra.mxu0 0.0
        %1400 = vmatprep.subr.mxu0 0.0
        %1401 = vmatpush1.msra.mxu0 0.0
        %1402 = vmatprep.subr.mxu0 0.0
        %1403 = vmatpush1.msra.mxu0 0.0
        %1404 = vmatprep.subr.mxu0 0.0
        %1405 = vmatpush1.msra.mxu0 0.0
        %1406 = vmatprep.subr.mxu0 0.0
        %1407 = vmatpush1.msra.mxu0 0.0
        %1408 = vmatprep.subr.mxu0 0.0
        %1409 = vmatpush1.msra.mxu0 0.0
        %1410 = vmatprep.subr.mxu0 0.0
        %1411 = vmatpush1.msra.mxu0 0.0
        %1412 = vmatprep.subr.mxu0 0.0
        %1413 = vmatpush1.msra.mxu0 0.0
        %1414 = vmatprep.subr.mxu0 0.0
        %1415 = vmatpush1.msra.mxu0 0.0
        %1416 = vmatprep.subr.mxu0 0.0
        %1417 = vmatpush1.msra.mxu0 0.0
        %1418 = vmatprep.subr.mxu0 0.0
        %1419 = vmatpush1.msra.mxu0 0.0
        %1420 = vmatprep.subr.mxu0 0.0
        %1421 = vmatpush1.msra.mxu0 0.0
        %1422 = vmatprep.subr.mxu0 0.0
        %1423 = vmatpush1.msra.mxu0 0.0
        %1424 = vmatprep.subr.mxu0 0.0
        %1425 = vmatpush1.msra.mxu0 0.0
        %1426 = vmatprep.subr.mxu0 0.0
        %1427 = vmatpush1.msra.mxu0 0.0
        %1428 = vmatprep.subr.mxu0 0.0
        %1429 = vmatpush1.msra.mxu0 0.0
        %1430 = vmatprep.subr.mxu0 0.0
        %1431 = vmatpush1.msra.mxu0 0.0
        %1432 = vmatprep.subr.mxu0 0.0
        %1433 = vmatpush1.msra.mxu0 0.0
        %1434 = vmatprep.subr.mxu0 0.0
        %1435 = vmatpush1.msra.mxu0 0.0
        %1436 = vmatprep.subr.mxu0 0.0
        %1437 = vmatpush1.msra.mxu0 0.0
        %1438 = vmatprep.subr.mxu0 0.0
        %1439 = vmatpush1.msra.mxu0 0.0
        %1440 = vmatprep.mubr.f32.mxu0 0.0
        %1441 = vmatmul.mubr.f32.gmra.mrb[0].mxu0 %v1374
        %v1442 = vpop.f32.mrb[0].mxu0
        %v1443 = vadd.f32 0.0, %v1442
        %v1444 = vpop.f32.mrb[0].mxu0
        %1445 = vdwg.mxu0
        %1446 = vst [vmem:[%s190] sm:$0x1] %v932
        %1447 = vst [vmem:[%s190 + $0x1] sm:$0x1] %v1005
        %1448 = vst [vmem:[%s190 + $0x2] sm:$0x1] %v1078
        %1449 = vst [vmem:[%s190 + $0x3] sm:$0x1] %v1151
        %1450 = vst [vmem:[%s190 + $0x4] sm:$0x1] %v1224
        %1451 = vst [vmem:[%s190 + $0x5] sm:$0x1] %v1297
        %1452 = vst [vmem:[%s190 + $0x6] sm:$0x1] %v1370
        %1453 = vst [vmem:[%s190 + $0x7] sm:$0x1] %v1443
        %s1454 = sand.u32 %s97, 1
        %s1455 = scalar_lea.sflag [#allocation5], %s1454
        %s1456 = sand.u32 %s97, 1
        %s1457 = smul.addr %s1456, 8
        %s1458 = scalar_lea.vmem [#allocation6], %s1457
        // Predicated region
        $region37: #{tpu_custom_call.1} parent=31 // pred_check
          %p1459 = pneg %p107
        $region38: #{tpu_custom_call.1} parent=31 // pred_check_branch
          %1461 = sbr.rel (%p1459) target = $region40
        $region39: #{tpu_custom_call.1} parent=31 // pred_region
          %s1462 = smul.u32 8, %s21
          %s1464 = ssub.s32 128, 128
          %1465 = vsyncadd %s1455, %s1464
          %s1466 = smul.addr %s1462, 16
          %s1467 = scalar_lea.hbm %s3, %s1466
          %s1468 = sshll.u32 %s1458, 4
          %s1469 = int_to_ptr.vmem [resolvable:$true] %s1468
          %1474 = dma.vmem_to_hbm [thread:$0]  %s1469, 128, %s1467, %s1455, 16, 16, 1
        $region40: #{tpu_custom_call.1} parent=31 // pred_fallthru
          _
      $region32: #{tpu_custom_call.1} parent=5 // pred_fallthru
        _
      %p1475 = scmp.le.s32.totalorder 2, %s16
      // Predicated region
      $region41: #{tpu_custom_call.1} parent=5 // pred_check
        %p1476 = pneg %p1475
      $region42: #{tpu_custom_call.1} parent=5 // pred_check_branch
        %1478 = sbr.rel (%p1476) target = $region44
      $region43: #{tpu_custom_call.1} parent=5 // pred_region
        %s1479 = ssub.s32 %s16, 2
        // Predicated region
        $region45: #{tpu_custom_call.1} parent=43 // pred_check
          %p1480 = pneg %p113
        $region46: #{tpu_custom_call.1} parent=43 // pred_check_branch
          %1482 = sbr.rel (%p1480) target = $region48
        $region47: #{tpu_custom_call.1} parent=43 // pred_region
          %s1483 = sand.u32 %s98, 1
          %s1484 = scalar_lea.sflag [#allocation5], %s1483
          %s1485 = sand.u32 %s98, 1
          %s1486 = smul.addr %s1485, 8
          %s1487 = scalar_lea.vmem [#allocation6], %s1486
          %1488 = dma.done %s1484, 128
        $region48: #{tpu_custom_call.1} parent=43 // pred_fallthru
          _
      $region44: #{tpu_custom_call.1} parent=5 // pred_fallthru
        _
    $region6: #{tpu_custom_call.1} parent=1 // loop_footer
      %s20 = sadd.s32 1, %s16
    $region7: #{tpu_custom_call.1} parent=1 // loop_footer_branch
      %15 = sbr.rel target = $region3
    $region8: #{tpu_custom_call.1} parent=1 // loop_exit
      _
    %1489 = vsyncpa [#allocation4], 1
    %s1490 = scalar_lea.sflag [#allocation4], 1
    %1491 = vsyncpa %s1490, 1
    %1492 = vsyncpa [#allocation5], 1
    %s1493 = scalar_lea.sflag [#allocation5], 1
    %1494 = vsyncpa %s1493, 1

</llo_original>
